<compile_context>
chip_gen: v7x
topology: tpu7x:2x2x1
jax: 0.10.0
libtpu: 0.0.40
codegen_flags: <defaults>
</compile_context>

<pallas_src>
import jax
import jax.numpy as jnp
from jax import lax
from jax.experimental import pallas as pl
from jax.experimental.pallas import tpu as pltpu

NEG_SLOPE = 0.01   # PyTorch nn.LeakyReLU / F.leaky_relu default
EPS = 1e-5         # PyTorch BatchNorm2d default


def _leaky(x):
    return jnp.where(x >= 0, x, NEG_SLOPE * x)


def residual_kernel(x_ref, w1_ref, b1_ref, sdn_ref, sup_ref, w2_ref, b2_ref,
                    w3_ref, b3_ref, gamma_ref, beta_ref, pool_ref, bcast_ref,
                    o_ref):
    f32 = jnp.float32
    x = x_ref[...].astype(f32)                          # (N*H, W*Cin), lane-dense

    # ---- conv1: 1x1 (Cin -> Ct) as one block-diagonal matmul + LeakyReLU ----
    h1 = _leaky(jnp.dot(x, w1_ref[...], preferred_element_type=f32)
                + b1_ref[...])                          # (N*H, W*Ct)

    # ---- conv2: 3x3, padding=1 ----------------------------------------------
    # Vertical taps via exact 0/1 row-shift matmuls (rows whose neighbour lies
    # outside the image come out exactly zero); horizontal taps + x-padding are
    # folded into banded weights w2_ref[dy].
    s_m1 = jnp.dot(sdn_ref[...], h1, preferred_element_type=f32)   # h1[r-1]
    s_p1 = jnp.dot(sup_ref[...], h1, preferred_element_type=f32)   # h1[r+1]
    a2 = (jnp.dot(s_m1, w2_ref[0], preferred_element_type=f32)
          + jnp.dot(h1, w2_ref[1], preferred_element_type=f32)
          + jnp.dot(s_p1, w2_ref[2], preferred_element_type=f32))
    h2 = _leaky(a2 + b2_ref[...])                       # (N*H, W*Ct)

    # ---- conv3: 1x1 (Ct -> Cin) block-diagonal matmul + residual add --------
    out = (jnp.dot(h2, w3_ref[...], preferred_element_type=f32)
           + b3_ref[...] + x)                           # (N*H, W*Cin)

    # ---- BatchNorm2d (training batch stats), single fused reduction pass ----
    w_cols = pool_ref.shape[0] // pool_ref.shape[1]     # = W (static)
    inv_count = 1.0 / float(out.shape[0] * w_cols)      # 1 / (N*H*W)
    s_sum = jnp.sum(out, axis=0, keepdims=True)         # (1, W*Cin)
    s_sq = jnp.sum(out * out, axis=0, keepdims=True)    # (1, W*Cin)
    c_sum = jnp.dot(s_sum, pool_ref[...], preferred_element_type=f32)  # (1,Cin)
    c_sq = jnp.dot(s_sq, pool_ref[...], preferred_element_type=f32)    # (1,Cin)
    mean = c_sum * inv_count
    var = c_sq * inv_count - mean * mean                # biased variance
    inv = lax.rsqrt(var + EPS)
    sc_c = gamma_ref[...] * inv                         # (1, Cin)
    sh_c = beta_ref[...] - mean * sc_c                  # (1, Cin)
    sc_l = jnp.dot(sc_c, bcast_ref[...], preferred_element_type=f32)   # (1, W*Cin)
    sh_l = jnp.dot(sh_c, bcast_ref[...], preferred_element_type=f32)   # (1, W*Cin)

    o_ref[...] = _leaky(out * sc_l + sh_l).astype(o_ref.dtype)


def pack_params(p, N, H, W):
    """Restructure Residual params for the lane-dense kernel (pure layout)."""
    f32 = jnp.float32
    Cin, Ct = p["w1"].shape

    eye_w = jnp.eye(W, dtype=f32)
    w1big = jnp.einsum("xy,ic->xiyc", eye_w, p["w1"]).reshape(W * Cin, W * Ct)
    w3big = jnp.einsum("xy,ic->xiyc", eye_w, p["w3"]).reshape(W * Ct, W * Cin)
    b1big = jnp.tile(p["b1"], (1, W))
    b2big = jnp.tile(p["b2"], (1, W))
    b3big = jnp.tile(p["b3"], (1, W))

    # 3x3 conv: per vertical tap dy, a banded (W*Ct, W*Ct) matrix encoding the
    # three horizontal taps and the zero padding along W.
    w2_4 = p["w2"].reshape(3, 3, Ct, Ct)                 # (dy, dx, ci, co)
    offs = jnp.arange(W)[:, None] - jnp.arange(W)[None, :] + 1   # x_in - x_out + 1
    blocks = []
    for dy in range(3):
        blk = jnp.zeros((W, Ct, W, Ct), f32)
        for dx in range(3):
            sel = (offs == dx).astype(f32)               # (W_in, W_out)
            blk = blk + jnp.einsum("xy,ic->xiyc", sel, w2_4[dy, dx])
        blocks.append(blk.reshape(W * Ct, W * Ct))
    w2full = jnp.stack(blocks, axis=0)                   # (3, W*Ct, W*Ct)

    # Exact 0/1 row-shift matrices over the flattened (N*H) row axis; rows
    # whose vertical neighbour falls outside the image are all-zero.
    nh = N * H
    r = jnp.arange(nh)
    sdn = ((r[:, None] - 1 == r[None, :])
           & ((r % H) != 0)[:, None]).astype(f32)        # row r <- h1[r-1]
    sup = ((r[:, None] + 1 == r[None, :])
           & ((r % H) != H - 1)[:, None]).astype(f32)    # row r <- h1[r+1]

    # Channel pooling / broadcast matrices for BatchNorm statistics.
    pool = jnp.tile(jnp.eye(Cin, dtype=f32), (W, 1))     # (W*Cin, Cin)
    bcast = pool.T                                       # (Cin, W*Cin)

    return (w1big, b1big, sdn, sup, w2full, b2big, w3big, b3big,
            p["gamma"], p["beta"], pool, bcast)


def residual_forward(x_nhwc, params):
    N, H, W, Cin = x_nhwc.shape
    nh, wc = N * H, W * Cin
    packed = pack_params(params, N, H, W)
    x2 = x_nhwc.reshape(nh, wc)                          # lane-dense input slab
    vmem = pl.BlockSpec(memory_space=pltpu.MemorySpace.VMEM)
    out2 = pl.pallas_call(
        residual_kernel,
        out_shape=jax.ShapeDtypeStruct((nh, wc), x_nhwc.dtype),
        in_specs=[vmem] * 13,
        out_specs=vmem,
        compiler_params=pltpu.CompilerParams(
            vmem_limit_bytes=32 * 1024 * 1024),
    )(x2, *packed)
    # TODO(synk): at production sizes (in_dim=256, larger H/W), tile N*H across
    # a ("parallel",) grid for v7x's two TensorCores and split the BatchNorm
    # statistics into a reduction pass; at this toy size one invocation wins.
    return out2.reshape(N, H, W, Cin)


def init_params(key, in_dim):
    """Deterministic synthetic init (PyTorch-like uniform fan-in scaling).

    Weight conventions (already transposed vs torch NCHW):
      w1: (Cin, Ct)      - 1x1 conv
      w2: (9, Ct, Ct)    - 3x3 conv, row-major over (dy, dx), each (Cin, Cout)
      w3: (Ct, Cin)      - 1x1 conv
      biases as (1, C) rows; gamma=1, beta=0 (fresh BatchNorm2d).
    """
    ct = in_dim // 4
    ks = jax.random.split(key, 6)
    s1 = 1.0 / jnp.sqrt(in_dim * 1.0)
    s2 = 1.0 / jnp.sqrt(ct * 9.0)
    s3 = 1.0 / jnp.sqrt(ct * 1.0)
    return dict(
        w1=jax.random.uniform(ks[0], (in_dim, ct), jnp.float32, -s1, s1),
        b1=jax.random.uniform(ks[1], (1, ct), jnp.float32, -s1, s1),
        w2=jax.random.uniform(ks[2], (9, ct, ct), jnp.float32, -s2, s2),
        b2=jax.random.uniform(ks[3], (1, ct), jnp.float32, -s2, s2),
        w3=jax.random.uniform(ks[4], (ct, in_dim), jnp.float32, -s3, s3),
        b3=jax.random.uniform(ks[5], (1, in_dim), jnp.float32, -s3, s3),
        gamma=jnp.ones((1, in_dim), jnp.float32),
        beta=jnp.zeros((1, in_dim), jnp.float32),
    )


def residual_ref(x_nhwc, p):
    """Pure-JAX reference (same math, no Pallas) for a correctness check."""
    x = x_nhwc.astype(jnp.float32)
    N, H, W, Cin = x.shape
    ct = p["w1"].shape[1]
    h1 = _leaky(jnp.einsum("nhwc,cd->nhwd", x, p["w1"],
                           precision=lax.Precision.HIGHEST) + p["b1"][0])
    k2 = p["w2"].reshape(3, 3, ct, ct)  # HWIO
    h2 = lax.conv_general_dilated(h1, k2, (1, 1), "SAME",
                                  dimension_numbers=("NHWC", "HWIO", "NHWC"),
                                  precision=lax.Precision.HIGHEST)
    h2 = _leaky(h2 + p["b2"][0])
    out = jnp.einsum("nhwc,cd->nhwd", h2, p["w3"],
                     precision=lax.Precision.HIGHEST) + p["b3"][0] + x
    flat = out.reshape(-1, Cin)
    mean = flat.mean(axis=0)
    var = ((flat - mean) ** 2).mean(axis=0)
    y = (out - mean) / jnp.sqrt(var + EPS) * p["gamma"][0] + p["beta"][0]
    return _leaky(y)


if __name__ == "__main__":
    key = jax.random.PRNGKey(0)
    kx, kp = jax.random.split(key)

    N, C, H, W = 2, 16, 16, 16              # in_dim=16 -> temp_channels=4
    x_nchw = jax.random.normal(kx, (N, C, H, W), jnp.float32)
    params = init_params(kp, C)

    x_nhwc = jnp.transpose(x_nchw, (0, 2, 3, 1))       # NCHW -> NHWC
    y_nhwc = residual_forward(x_nhwc, params)
    y = jnp.transpose(y_nhwc, (0, 3, 1, 2))            # back to NCHW
    jax.block_until_ready(y)

    y_ref = jnp.transpose(residual_ref(x_nhwc, params), (0, 3, 1, 2))
    max_err = float(jnp.max(jnp.abs(y - y_ref)))
    assert jnp.allclose(y, y_ref, atol=1e-3, rtol=1e-3), f"max_err={max_err}"

    print("KERNEL_OK")
</pallas_src>

<mosaic_0001>
module attributes {stable_mosaic.version = 11 : i64} {
  func.func @residual_kernel(%arg0: memref<32x256xf32, #tpu.memory_space<vmem>>, %arg1: memref<256x64xf32, #tpu.memory_space<vmem>>, %arg2: memref<1x64xf32, #tpu.memory_space<vmem>>, %arg3: memref<32x32xf32, #tpu.memory_space<vmem>>, %arg4: memref<32x32xf32, #tpu.memory_space<vmem>>, %arg5: memref<3x64x64xf32, #tpu.memory_space<vmem>>, %arg6: memref<1x64xf32, #tpu.memory_space<vmem>>, %arg7: memref<64x256xf32, #tpu.memory_space<vmem>>, %arg8: memref<1x256xf32, #tpu.memory_space<vmem>>, %arg9: memref<1x16xf32, #tpu.memory_space<vmem>>, %arg10: memref<1x16xf32, #tpu.memory_space<vmem>>, %arg11: memref<256x16xf32, #tpu.memory_space<vmem>>, %arg12: memref<16x256xf32, #tpu.memory_space<vmem>>, %arg13: memref<32x256xf32, #tpu.memory_space<vmem>>) attributes {dimension_semantics = [], scalar_prefetch = 0 : i64, scratch_operands = 0 : i64, tpu.core_type = #tpu.core_type<tc>} {
    %c0 = arith.constant 0 : index
    %c0_0 = arith.constant 0 : index
    %0 = vector.load %arg0[%c0, %c0_0] : memref<32x256xf32, #tpu.memory_space<vmem>>, vector<32x256xf32>
    %c0_1 = arith.constant 0 : index
    %c0_2 = arith.constant 0 : index
    %1 = vector.load %arg1[%c0_1, %c0_2] : memref<256x64xf32, #tpu.memory_space<vmem>>, vector<256x64xf32>
    %cst = arith.constant dense<0.000000e+00> : vector<32x64xf32>
    %2 = tpu.matmul %0, %1, %cst {dimension_numbers = #tpu.dot_dimension_numbers<[1], [0], [0], [1], [0, 0, 1, 1], [], []>} : vector<32x256xf32>, vector<256x64xf32>, vector<32x64xf32> -> vector<32x64xf32>
    %c0_3 = arith.constant 0 : index
    %c0_4 = arith.constant 0 : index
    %3 = vector.load %arg2[%c0_3, %c0_4] : memref<1x64xf32, #tpu.memory_space<vmem>>, vector<1x64xf32>
    %4 = vector.broadcast %3 : vector<1x64xf32> to vector<32x64xf32>
    %5 = arith.addf %2, %4 : vector<32x64xf32>
    %cst_5 = arith.constant 0.000000e+00 : f32
    %6 = vector.broadcast %cst_5 : f32 to vector<32x64xf32>
    %7 = arith.cmpf oge, %5, %6 : vector<32x64xf32>
    %cst_6 = arith.constant 0.00999999977 : f32
    %8 = vector.broadcast %cst_6 : f32 to vector<32x64xf32>
    %9 = arith.mulf %8, %5 : vector<32x64xf32>
    %10 = arith.select %7, %5, %9 : vector<32x64xi1>, vector<32x64xf32>
    %c0_7 = arith.constant 0 : index
    %c0_8 = arith.constant 0 : index
    %11 = vector.load %arg3[%c0_7, %c0_8] : memref<32x32xf32, #tpu.memory_space<vmem>>, vector<32x32xf32>
    %cst_9 = arith.constant dense<0.000000e+00> : vector<32x64xf32>
    %12 = tpu.matmul %11, %10, %cst_9 {dimension_numbers = #tpu.dot_dimension_numbers<[1], [0], [0], [1], [0, 0, 1, 1], [], []>} : vector<32x32xf32>, vector<32x64xf32>, vector<32x64xf32> -> vector<32x64xf32>
    %c0_10 = arith.constant 0 : index
    %c0_11 = arith.constant 0 : index
    %13 = vector.load %arg4[%c0_10, %c0_11] : memref<32x32xf32, #tpu.memory_space<vmem>>, vector<32x32xf32>
    %cst_12 = arith.constant dense<0.000000e+00> : vector<32x64xf32>
    %14 = tpu.matmul %13, %10, %cst_12 {dimension_numbers = #tpu.dot_dimension_numbers<[1], [0], [0], [1], [0, 0, 1, 1], [], []>} : vector<32x32xf32>, vector<32x64xf32>, vector<32x64xf32> -> vector<32x64xf32>
    %c0_13 = arith.constant 0 : index
    %c0_14 = arith.constant 0 : index
    %c0_15 = arith.constant 0 : index
    %15 = vector.load %arg5[%c0_13, %c0_14, %c0_15] : memref<3x64x64xf32, #tpu.memory_space<vmem>>, vector<1x64x64xf32>
    %16 = vector.shape_cast %15 : vector<1x64x64xf32> to vector<64x64xf32>
    %cst_16 = arith.constant dense<0.000000e+00> : vector<32x64xf32>
    %17 = tpu.matmul %12, %16, %cst_16 {dimension_numbers = #tpu.dot_dimension_numbers<[1], [0], [0], [1], [0, 0, 1, 1], [], []>} : vector<32x64xf32>, vector<64x64xf32>, vector<32x64xf32> -> vector<32x64xf32>
    %c1 = arith.constant 1 : index
    %c0_17 = arith.constant 0 : index
    %c0_18 = arith.constant 0 : index
    %18 = vector.load %arg5[%c1, %c0_17, %c0_18] : memref<3x64x64xf32, #tpu.memory_space<vmem>>, vector<1x64x64xf32>
    %19 = vector.shape_cast %18 : vector<1x64x64xf32> to vector<64x64xf32>
    %cst_19 = arith.constant dense<0.000000e+00> : vector<32x64xf32>
    %20 = tpu.matmul %10, %19, %cst_19 {dimension_numbers = #tpu.dot_dimension_numbers<[1], [0], [0], [1], [0, 0, 1, 1], [], []>} : vector<32x64xf32>, vector<64x64xf32>, vector<32x64xf32> -> vector<32x64xf32>
    %21 = arith.addf %17, %20 : vector<32x64xf32>
    %c2 = arith.constant 2 : index
    %c0_20 = arith.constant 0 : index
    %c0_21 = arith.constant 0 : index
    %22 = vector.load %arg5[%c2, %c0_20, %c0_21] : memref<3x64x64xf32, #tpu.memory_space<vmem>>, vector<1x64x64xf32>
    %23 = vector.shape_cast %22 : vector<1x64x64xf32> to vector<64x64xf32>
    %cst_22 = arith.constant dense<0.000000e+00> : vector<32x64xf32>
    %24 = tpu.matmul %14, %23, %cst_22 {dimension_numbers = #tpu.dot_dimension_numbers<[1], [0], [0], [1], [0, 0, 1, 1], [], []>} : vector<32x64xf32>, vector<64x64xf32>, vector<32x64xf32> -> vector<32x64xf32>
    %25 = arith.addf %21, %24 : vector<32x64xf32>
    %c0_23 = arith.constant 0 : index
    %c0_24 = arith.constant 0 : index
    %26 = vector.load %arg6[%c0_23, %c0_24] : memref<1x64xf32, #tpu.memory_space<vmem>>, vector<1x64xf32>
    %27 = vector.broadcast %26 : vector<1x64xf32> to vector<32x64xf32>
    %28 = arith.addf %25, %27 : vector<32x64xf32>
    %cst_25 = arith.constant 0.000000e+00 : f32
    %29 = vector.broadcast %cst_25 : f32 to vector<32x64xf32>
    %30 = arith.cmpf oge, %28, %29 : vector<32x64xf32>
    %cst_26 = arith.constant 0.00999999977 : f32
    %31 = vector.broadcast %cst_26 : f32 to vector<32x64xf32>
    %32 = arith.mulf %31, %28 : vector<32x64xf32>
    %33 = arith.select %30, %28, %32 : vector<32x64xi1>, vector<32x64xf32>
    %c0_27 = arith.constant 0 : index
    %c0_28 = arith.constant 0 : index
    %34 = vector.load %arg7[%c0_27, %c0_28] : memref<64x256xf32, #tpu.memory_space<vmem>>, vector<64x256xf32>
    %cst_29 = arith.constant dense<0.000000e+00> : vector<32x256xf32>
    %35 = tpu.matmul %33, %34, %cst_29 {dimension_numbers = #tpu.dot_dimension_numbers<[1], [0], [0], [1], [0, 0, 1, 1], [], []>} : vector<32x64xf32>, vector<64x256xf32>, vector<32x256xf32> -> vector<32x256xf32>
    %c0_30 = arith.constant 0 : index
    %c0_31 = arith.constant 0 : index
    %36 = vector.load %arg8[%c0_30, %c0_31] : memref<1x256xf32, #tpu.memory_space<vmem>>, vector<1x256xf32>
    %37 = vector.broadcast %36 : vector<1x256xf32> to vector<32x256xf32>
    %38 = arith.addf %35, %37 : vector<32x256xf32>
    %39 = arith.addf %38, %0 : vector<32x256xf32>
    %cst_32 = arith.constant dense<0.000000e+00> : vector<256xf32>
    %40 = vector.multi_reduction <add>, %39, %cst_32 [0] : vector<32x256xf32> to vector<256xf32>
    %41 = vector.shape_cast %40 : vector<256xf32> to vector<1x256xf32>
    %42 = arith.mulf %39, %39 : vector<32x256xf32>
    %cst_33 = arith.constant dense<0.000000e+00> : vector<256xf32>
    %43 = vector.multi_reduction <add>, %42, %cst_33 [0] : vector<32x256xf32> to vector<256xf32>
    %44 = vector.shape_cast %43 : vector<256xf32> to vector<1x256xf32>
    %c0_34 = arith.constant 0 : index
    %c0_35 = arith.constant 0 : index
    %45 = vector.load %arg11[%c0_34, %c0_35] : memref<256x16xf32, #tpu.memory_space<vmem>>, vector<256x16xf32>
    %cst_36 = arith.constant dense<0.000000e+00> : vector<1x16xf32>
    %46 = tpu.matmul %41, %45, %cst_36 {dimension_numbers = #tpu.dot_dimension_numbers<[1], [0], [0], [1], [0, 0, 1, 1], [], []>} : vector<1x256xf32>, vector<256x16xf32>, vector<1x16xf32> -> vector<1x16xf32>
    %c0_37 = arith.constant 0 : index
    %c0_38 = arith.constant 0 : index
    %47 = vector.load %arg11[%c0_37, %c0_38] : memref<256x16xf32, #tpu.memory_space<vmem>>, vector<256x16xf32>
    %cst_39 = arith.constant dense<0.000000e+00> : vector<1x16xf32>
    %48 = tpu.matmul %44, %47, %cst_39 {dimension_numbers = #tpu.dot_dimension_numbers<[1], [0], [0], [1], [0, 0, 1, 1], [], []>} : vector<1x256xf32>, vector<256x16xf32>, vector<1x16xf32> -> vector<1x16xf32>
    %cst_40 = arith.constant 0.001953125 : f32
    %49 = vector.broadcast %cst_40 : f32 to vector<1x16xf32>
    %50 = arith.mulf %46, %49 : vector<1x16xf32>
    %cst_41 = arith.constant 0.001953125 : f32
    %51 = vector.broadcast %cst_41 : f32 to vector<1x16xf32>
    %52 = arith.mulf %48, %51 : vector<1x16xf32>
    %53 = arith.mulf %50, %50 : vector<1x16xf32>
    %54 = arith.subf %52, %53 : vector<1x16xf32>
    %cst_42 = arith.constant 9.99999974E-6 : f32
    %55 = vector.broadcast %cst_42 : f32 to vector<1x16xf32>
    %56 = arith.addf %54, %55 : vector<1x16xf32>
    %57 = math.rsqrt %56 : vector<1x16xf32>
    %c0_43 = arith.constant 0 : index
    %c0_44 = arith.constant 0 : index
    %58 = vector.load %arg9[%c0_43, %c0_44] : memref<1x16xf32, #tpu.memory_space<vmem>>, vector<1x16xf32>
    %59 = arith.mulf %58, %57 : vector<1x16xf32>
    %c0_45 = arith.constant 0 : index
    %c0_46 = arith.constant 0 : index
    %60 = vector.load %arg10[%c0_45, %c0_46] : memref<1x16xf32, #tpu.memory_space<vmem>>, vector<1x16xf32>
    %61 = arith.mulf %50, %59 : vector<1x16xf32>
    %62 = arith.subf %60, %61 : vector<1x16xf32>
    %c0_47 = arith.constant 0 : index
    %c0_48 = arith.constant 0 : index
    %63 = vector.load %arg12[%c0_47, %c0_48] : memref<16x256xf32, #tpu.memory_space<vmem>>, vector<16x256xf32>
    %cst_49 = arith.constant dense<0.000000e+00> : vector<1x256xf32>
    %64 = tpu.matmul %59, %63, %cst_49 {dimension_numbers = #tpu.dot_dimension_numbers<[1], [0], [0], [1], [0, 0, 1, 1], [], []>} : vector<1x16xf32>, vector<16x256xf32>, vector<1x256xf32> -> vector<1x256xf32>
    %c0_50 = arith.constant 0 : index
    %c0_51 = arith.constant 0 : index
    %65 = vector.load %arg12[%c0_50, %c0_51] : memref<16x256xf32, #tpu.memory_space<vmem>>, vector<16x256xf32>
    %cst_52 = arith.constant dense<0.000000e+00> : vector<1x256xf32>
    %66 = tpu.matmul %62, %65, %cst_52 {dimension_numbers = #tpu.dot_dimension_numbers<[1], [0], [0], [1], [0, 0, 1, 1], [], []>} : vector<1x16xf32>, vector<16x256xf32>, vector<1x256xf32> -> vector<1x256xf32>
    %67 = vector.broadcast %64 : vector<1x256xf32> to vector<32x256xf32>
    %68 = arith.mulf %39, %67 : vector<32x256xf32>
    %69 = vector.broadcast %66 : vector<1x256xf32> to vector<32x256xf32>
    %70 = arith.addf %68, %69 : vector<32x256xf32>
    %cst_53 = arith.constant 0.000000e+00 : f32
    %71 = vector.broadcast %cst_53 : f32 to vector<32x256xf32>
    %72 = arith.cmpf oge, %70, %71 : vector<32x256xf32>
    %cst_54 = arith.constant 0.00999999977 : f32
    %73 = vector.broadcast %cst_54 : f32 to vector<32x256xf32>
    %74 = arith.mulf %73, %70 : vector<32x256xf32>
    %75 = arith.select %72, %70, %74 : vector<32x256xi1>, vector<32x256xf32>
    %c0_55 = arith.constant 0 : index
    %c0_56 = arith.constant 0 : index
    %76 = vector.load %arg13[%c0_55, %c0_56] : memref<32x256xf32, #tpu.memory_space<vmem>>, vector<32x256xf32>
    tpu.vector_store %arg13[%c0_55, %c0_56], %75 {strides = array<i32>} : memref<32x256xf32, #tpu.memory_space<vmem>>, vector<32x256xf32>,
    return
  }
}

</mosaic_0001>

<llo_original>
// kernel: tpu_custom_call.1
$region0: #{tpu_custom_call.1}
  #allocation0 [shape = 'u32[]', space=smem, size = 0x4, offset = 0x4, fixed_abs, tag = 'smem constant byte address 0x4 - core index']
  #allocation1 [shape = 'u32[144,128]{1,0:T(1,128)}', space=vmem, size = 0x12000, scoped, tag = 'internal scratch']
  %s0 = inlined_call_operand.vmem [shape: f32[32,256], index: 0, kind: input, shape index: {}]
  %s1 = inlined_call_operand.vmem [shape: f32[256,64], index: 1, kind: input, shape index: {}]
  %s2 = inlined_call_operand.vmem [shape: f32[1,64], index: 2, kind: input, shape index: {}]
  %s3 = inlined_call_operand.vmem [shape: f32[32,32], index: 3, kind: input, shape index: {}]
  %s4 = inlined_call_operand.vmem [shape: f32[32,32], index: 4, kind: input, shape index: {}]
  %s5 = inlined_call_operand.vmem [shape: f32[3,64,64], index: 5, kind: input, shape index: {}]
  %s6 = inlined_call_operand.vmem [shape: f32[1,64], index: 6, kind: input, shape index: {}]
  %s7 = inlined_call_operand.vmem [shape: f32[64,256], index: 7, kind: input, shape index: {}]
  %s8 = inlined_call_operand.vmem [shape: f32[1,256], index: 8, kind: input, shape index: {}]
  %s9 = inlined_call_operand.vmem [shape: f32[1,16], index: 9, kind: input, shape index: {}]
  %s10 = inlined_call_operand.vmem [shape: f32[1,16], index: 10, kind: input, shape index: {}]
  %s11 = inlined_call_operand.vmem [shape: f32[256,16], index: 11, kind: input, shape index: {}]
  %s12 = inlined_call_operand.vmem [shape: f32[16,256], index: 12, kind: input, shape index: {}]
  %s13 = inlined_call_operand.hbm [shape: f32[32,256], index: 13, kind: output, shape index: {}]
  %s14 = sld [smem:[#allocation0]]
  $region62: #{tpu_custom_call.1} parent=0
    _
  %s16 = ssub.s32 1, %s14
  %s17 = scalar_select 0, %s16, %s14
  $region1: #{tpu_custom_call.1} parent=0
    #allocation2 [shape = 'u8[32768]{0}', space=vmem, size = 0x8000, scoped, tag = 'output window, operand 0, single buffered']
    #allocation3 [shape = 's32[1]{0}', space=sflag, size = 0x4, scoped, tag = 'scoped memory for tpu_custom_call.1']
    %18 = vsyncpa [#allocation3], 0
    // Predicated region
    $region2: #{tpu_custom_call.1} parent=1 // pred_check
      _
    $region3: #{tpu_custom_call.1} parent=1 // pred_check_branch
      %20 = sbr.rel (0) target = $region5
    $region4: #{tpu_custom_call.1} parent=1 // pred_region
      _
    $region5: #{tpu_custom_call.1} parent=1 // pred_fallthru
      _
    // Predicated region
    $region6: #{tpu_custom_call.1} parent=1 // pred_check
      _
    $region7: #{tpu_custom_call.1} parent=1 // pred_check_branch
      %22 = sbr.rel (0) target = $region9
    $region8: #{tpu_custom_call.1} parent=1 // pred_region
      _
    $region9: #{tpu_custom_call.1} parent=1 // pred_fallthru
      _
    // Predicated region
    $region10: #{tpu_custom_call.1} parent=1 // pred_check
      _
    $region11: #{tpu_custom_call.1} parent=1 // pred_check_branch
      %24 = sbr.rel (0) target = $region13
    $region12: #{tpu_custom_call.1} parent=1 // pred_region
      _
    $region13: #{tpu_custom_call.1} parent=1 // pred_fallthru
      _
    // Predicated region
    $region14: #{tpu_custom_call.1} parent=1 // pred_check
      _
    $region15: #{tpu_custom_call.1} parent=1 // pred_check_branch
      %26 = sbr.rel (0) target = $region17
    $region16: #{tpu_custom_call.1} parent=1 // pred_region
      _
    $region17: #{tpu_custom_call.1} parent=1 // pred_fallthru
      _
    // Predicated region
    $region18: #{tpu_custom_call.1} parent=1 // pred_check
      _
    $region19: #{tpu_custom_call.1} parent=1 // pred_check_branch
      %28 = sbr.rel (0) target = $region21
    $region20: #{tpu_custom_call.1} parent=1 // pred_region
      _
    $region21: #{tpu_custom_call.1} parent=1 // pred_fallthru
      _
    // Predicated region
    $region22: #{tpu_custom_call.1} parent=1 // pred_check
      _
    $region23: #{tpu_custom_call.1} parent=1 // pred_check_branch
      %30 = sbr.rel (0) target = $region25
    $region24: #{tpu_custom_call.1} parent=1 // pred_region
      _
    $region25: #{tpu_custom_call.1} parent=1 // pred_fallthru
      _
    // Predicated region
    $region26: #{tpu_custom_call.1} parent=1 // pred_check
      _
    $region27: #{tpu_custom_call.1} parent=1 // pred_check_branch
      %32 = sbr.rel (0) target = $region29
    $region28: #{tpu_custom_call.1} parent=1 // pred_region
      _
    $region29: #{tpu_custom_call.1} parent=1 // pred_fallthru
      _
    // Predicated region
    $region30: #{tpu_custom_call.1} parent=1 // pred_check
      _
    $region31: #{tpu_custom_call.1} parent=1 // pred_check_branch
      %34 = sbr.rel (0) target = $region33
    $region32: #{tpu_custom_call.1} parent=1 // pred_region
      _
    $region33: #{tpu_custom_call.1} parent=1 // pred_fallthru
      _
    // Predicated region
    $region34: #{tpu_custom_call.1} parent=1 // pred_check
      _
    $region35: #{tpu_custom_call.1} parent=1 // pred_check_branch
      %36 = sbr.rel (0) target = $region37
    $region36: #{tpu_custom_call.1} parent=1 // pred_region
      _
    $region37: #{tpu_custom_call.1} parent=1 // pred_fallthru
      _
    // Predicated region
    $region38: #{tpu_custom_call.1} parent=1 // pred_check
      _
    $region39: #{tpu_custom_call.1} parent=1 // pred_check_branch
      %38 = sbr.rel (0) target = $region41
    $region40: #{tpu_custom_call.1} parent=1 // pred_region
      _
    $region41: #{tpu_custom_call.1} parent=1 // pred_fallthru
      _
    // Predicated region
    $region42: #{tpu_custom_call.1} parent=1 // pred_check
      _
    $region43: #{tpu_custom_call.1} parent=1 // pred_check_branch
      %40 = sbr.rel (0) target = $region45
    $region44: #{tpu_custom_call.1} parent=1 // pred_region
      _
    $region45: #{tpu_custom_call.1} parent=1 // pred_fallthru
      _
    // Predicated region
    $region46: #{tpu_custom_call.1} parent=1 // pred_check
      _
    $region47: #{tpu_custom_call.1} parent=1 // pred_check_branch
      %42 = sbr.rel (0) target = $region49
    $region48: #{tpu_custom_call.1} parent=1 // pred_region
      _
    $region49: #{tpu_custom_call.1} parent=1 // pred_fallthru
      _
    // Predicated region
    $region50: #{tpu_custom_call.1} parent=1 // pred_check
      _
    $region51: #{tpu_custom_call.1} parent=1 // pred_check_branch
      %44 = sbr.rel (0) target = $region53
    $region52: #{tpu_custom_call.1} parent=1 // pred_region
      _
    $region53: #{tpu_custom_call.1} parent=1 // pred_fallthru
      _
    %v45 = vld [vmem:[%s0] sm:$0xff]
    %v46 = vld [vmem:[%s0 + $0x8] sm:$0xff]
    %v47 = vld [vmem:[%s0 + $0x10] sm:$0xff]
    %v48 = vld [vmem:[%s0 + $0x18] sm:$0xff]
    %v49 = vld [vmem:[%s0 + $0x20] sm:$0xff]
    %v50 = vld [vmem:[%s0 + $0x28] sm:$0xff]
    %v51 = vld [vmem:[%s0 + $0x30] sm:$0xff]
    %v52 = vld [vmem:[%s0 + $0x38] sm:$0xff]
    %v53 = vld [vmem:[%s1] sm:$0xff]
    %v54 = vld [vmem:[%s1 + $0x8] sm:$0xff]
    %v55 = vld [vmem:[%s1 + $0x10] sm:$0xff]
    %v56 = vld [vmem:[%s1 + $0x18] sm:$0xff]
    %v57 = vld [vmem:[%s1 + $0x20] sm:$0xff]
    %v58 = vld [vmem:[%s1 + $0x28] sm:$0xff]
    %v59 = vld [vmem:[%s1 + $0x30] sm:$0xff]
    %v60 = vld [vmem:[%s1 + $0x38] sm:$0xff]
    %v61 = vld [vmem:[%s1 + $0x40] sm:$0xff]
    %v62 = vld [vmem:[%s1 + $0x48] sm:$0xff]
    %v63 = vld [vmem:[%s1 + $0x50] sm:$0xff]
    %v64 = vld [vmem:[%s1 + $0x58] sm:$0xff]
    %v65 = vld [vmem:[%s1 + $0x60] sm:$0xff]
    %v66 = vld [vmem:[%s1 + $0x68] sm:$0xff]
    %v67 = vld [vmem:[%s1 + $0x70] sm:$0xff]
    %v68 = vld [vmem:[%s1 + $0x78] sm:$0xff]
    %v69 = vld [vmem:[%s1 + $0x80] sm:$0xff]
    %v70 = vld [vmem:[%s1 + $0x88] sm:$0xff]
    %v71 = vld [vmem:[%s1 + $0x90] sm:$0xff]
    %v72 = vld [vmem:[%s1 + $0x98] sm:$0xff]
    %v73 = vld [vmem:[%s1 + $0xa0] sm:$0xff]
    %v74 = vld [vmem:[%s1 + $0xa8] sm:$0xff]
    %v75 = vld [vmem:[%s1 + $0xb0] sm:$0xff]
    %v76 = vld [vmem:[%s1 + $0xb8] sm:$0xff]
    %v77 = vld [vmem:[%s1 + $0xc0] sm:$0xff]
    %v78 = vld [vmem:[%s1 + $0xc8] sm:$0xff]
    %v79 = vld [vmem:[%s1 + $0xd0] sm:$0xff]
    %v80 = vld [vmem:[%s1 + $0xd8] sm:$0xff]
    %v81 = vld [vmem:[%s1 + $0xe0] sm:$0xff]
    %v82 = vld [vmem:[%s1 + $0xe8] sm:$0xff]
    %v83 = vld [vmem:[%s1 + $0xf0] sm:$0xff]
    %v84 = vld [vmem:[%s1 + $0xf8] sm:$0xff]
    %v85 = vld [vmem:[%s2] sm:$0x1]
    %v87 = vlaneseq
    %v88 = vshrl.u32 %v87, 7
    %v89 = vsub.s32 0, %v88
    %v90 = vrot.slane %v85, %v89
    %92 = vmatprep.subr.mxu0 0.0
    %93 = vmatpush1.msra.mxu0 %v53
    %94 = vmatprep.subr.mxu0 0.0
    %95 = vmatpush1.msra.mxu0 %v54
    %96 = vmatprep.subr.mxu0 0.0
    %97 = vmatpush1.msra.mxu0 %v55
    %98 = vmatprep.subr.mxu0 0.0
    %99 = vmatpush1.msra.mxu0 %v56
    %100 = vmatprep.subr.mxu0 0.0
    %101 = vmatpush1.msra.mxu0 %v57
    %102 = vmatprep.subr.mxu0 0.0
    %103 = vmatpush1.msra.mxu0 %v58
    %104 = vmatprep.subr.mxu0 0.0
    %105 = vmatpush1.msra.mxu0 %v59
    %106 = vmatprep.subr.mxu0 0.0
    %107 = vmatpush1.msra.mxu0 %v60
    %108 = vmatprep.subr.mxu0 0.0
    %109 = vmatpush1.msra.mxu0 %v61
    %110 = vmatprep.subr.mxu0 0.0
    %111 = vmatpush1.msra.mxu0 %v62
    %112 = vmatprep.subr.mxu0 0.0
    %113 = vmatpush1.msra.mxu0 %v63
    %114 = vmatprep.subr.mxu0 0.0
    %115 = vmatpush1.msra.mxu0 %v64
    %116 = vmatprep.subr.mxu0 0.0
    %117 = vmatpush1.msra.mxu0 %v65
    %118 = vmatprep.subr.mxu0 0.0
    %119 = vmatpush1.msra.mxu0 %v66
    %120 = vmatprep.subr.mxu0 0.0
    %121 = vmatpush1.msra.mxu0 %v67
    %122 = vmatprep.subr.mxu0 0.0
    %123 = vmatpush1.msra.mxu0 %v68
    %124 = vmatprep.subr.mxu0 0.0
    %125 = vmatpush1.msra.mxu0 %v69
    %126 = vmatprep.subr.mxu0 0.0
    %127 = vmatpush1.msra.mxu0 %v70
    %128 = vmatprep.subr.mxu0 0.0
    %129 = vmatpush1.msra.mxu0 %v71
    %130 = vmatprep.subr.mxu0 0.0
    %131 = vmatpush1.msra.mxu0 %v72
    %132 = vmatprep.subr.mxu0 0.0
    %133 = vmatpush1.msra.mxu0 %v73
    %134 = vmatprep.subr.mxu0 0.0
    %135 = vmatpush1.msra.mxu0 %v74
    %136 = vmatprep.subr.mxu0 0.0
    %137 = vmatpush1.msra.mxu0 %v75
    %138 = vmatprep.subr.mxu0 0.0
    %139 = vmatpush1.msra.mxu0 %v76
    %140 = vmatprep.subr.mxu0 0.0
    %141 = vmatpush1.msra.mxu0 %v77
    %142 = vmatprep.subr.mxu0 0.0
    %143 = vmatpush1.msra.mxu0 %v78
    %144 = vmatprep.subr.mxu0 0.0
    %145 = vmatpush1.msra.mxu0 %v79
    %146 = vmatprep.subr.mxu0 0.0
    %147 = vmatpush1.msra.mxu0 %v80
    %148 = vmatprep.subr.mxu0 0.0
    %149 = vmatpush1.msra.mxu0 %v81
    %150 = vmatprep.subr.mxu0 0.0
    %151 = vmatpush1.msra.mxu0 %v82
    %152 = vmatprep.subr.mxu0 0.0
    %153 = vmatpush1.msra.mxu0 %v83
    %154 = vmatprep.subr.mxu0 0.0
    %155 = vmatpush1.msra.mxu0 %v84
    %156 = vmatprep.mubr.f32.mxu0 %v46
    %157 = vmatmul.mubr.f32.gmra.mrb[0].mxu0 %v45
    %v158 = vpop.f32.mrb[0].mxu0
    %v159 = vadd.f32 %v90, %v158
    %v160 = vpop.f32.mrb[0].mxu0
    %161 = vmatprep.mubr.f32.mxu0 %v48
    %162 = vmatmul.mubr.f32.gmra.mrb[0].mxu0 %v47
    %v163 = vpop.f32.mrb[0].mxu0
    %v164 = vadd.f32 %v90, %v163
    %v165 = vpop.f32.mrb[0].mxu0
    %166 = vmatprep.mubr.f32.mxu0 %v50
    %167 = vmatmul.mubr.f32.gmra.mrb[0].mxu0 %v49
    %v168 = vpop.f32.mrb[0].mxu0
    %v169 = vadd.f32 %v90, %v168
    %v170 = vpop.f32.mrb[0].mxu0
    %171 = vmatprep.mubr.f32.mxu0 %v52
    %172 = vmatmul.mubr.f32.gmra.mrb[0].mxu0 %v51
    %v173 = vpop.f32.mrb[0].mxu0
    %v174 = vadd.f32 %v90, %v173
    %v175 = vpop.f32.mrb[0].mxu0
    %176 = vdwg.mxu0
    %vm177 = vcmp.ge.f32.partialorder %v159, 0.0
    %vm178 = vcmp.ge.f32.partialorder %v164, 0.0
    %vm179 = vcmp.ge.f32.partialorder %v169, 0.0
    %vm180 = vcmp.ge.f32.partialorder %v174, 0.0
    %v181 = vmul.f32 %v159, 0.01
    %v182 = vmul.f32 %v164, 0.01
    %v183 = vmul.f32 %v169, 0.01
    %v184 = vmul.f32 %v174, 0.01
    %v185 = vsel %vm177, %v159, %v181
    %v186 = vsel %vm178, %v164, %v182
    %v187 = vsel %vm179, %v169, %v183
    %v188 = vsel %vm180, %v174, %v184
    %v189 = vld [vmem:[%s3] sm:$0xff]
    %v190 = vld [vmem:[%s3 + $0x8] sm:$0xff]
    %v191 = vld [vmem:[%s3 + $0x10] sm:$0xff]
    %v192 = vld [vmem:[%s3 + $0x18] sm:$0xff]
    %vm193 = vcmask 261120
    %v195 = vsel %vm193, %v189, 0
    %v198 = vsel %vm193, %v190, 0
    %v201 = vsel %vm193, %v191, 0
    %v204 = vsel %vm193, %v192, 0
    %206 = vmatprep.subr.mxu0 0.0
    %207 = vmatpush1.msra.mxu0 %v185
    %208 = vmatprep.subr.mxu0 0.0
    %209 = vmatpush1.msra.mxu0 %v186
    %210 = vmatprep.subr.mxu0 0.0
    %211 = vmatpush1.msra.mxu0 %v187
    %212 = vmatprep.subr.mxu0 0.0
    %213 = vmatpush1.msra.mxu0 %v188
    %214 = vmatprep.subr.mxu0 0.0
    %215 = vmatpush1.msra.mxu0 0.0
    %216 = vmatprep.subr.mxu0 0.0
    %217 = vmatpush1.msra.mxu0 0.0
    %218 = vmatprep.subr.mxu0 0.0
    %219 = vmatpush1.msra.mxu0 0.0
    %220 = vmatprep.subr.mxu0 0.0
    %221 = vmatpush1.msra.mxu0 0.0
    %222 = vmatprep.subr.mxu0 0.0
    %223 = vmatpush1.msra.mxu0 0.0
    %224 = vmatprep.subr.mxu0 0.0
    %225 = vmatpush1.msra.mxu0 0.0
    %226 = vmatprep.subr.mxu0 0.0
    %227 = vmatpush1.msra.mxu0 0.0
    %228 = vmatprep.subr.mxu0 0.0
    %229 = vmatpush1.msra.mxu0 0.0
    %230 = vmatprep.subr.mxu0 0.0
    %231 = vmatpush1.msra.mxu0 0.0
    %232 = vmatprep.subr.mxu0 0.0
    %233 = vmatpush1.msra.mxu0 0.0
    %234 = vmatprep.subr.mxu0 0.0
    %235 = vmatpush1.msra.mxu0 0.0
    %236 = vmatprep.subr.mxu0 0.0
    %237 = vmatpush1.msra.mxu0 0.0
    %238 = vmatprep.subr.mxu0 0.0
    %239 = vmatpush1.msra.mxu0 0.0
    %240 = vmatprep.subr.mxu0 0.0
    %241 = vmatpush1.msra.mxu0 0.0
    %242 = vmatprep.subr.mxu0 0.0
    %243 = vmatpush1.msra.mxu0 0.0
    %244 = vmatprep.subr.mxu0 0.0
    %245 = vmatpush1.msra.mxu0 0.0
    %246 = vmatprep.subr.mxu0 0.0
    %247 = vmatpush1.msra.mxu0 0.0
    %248 = vmatprep.subr.mxu0 0.0
    %249 = vmatpush1.msra.mxu0 0.0
    %250 = vmatprep.subr.mxu0 0.0
    %251 = vmatpush1.msra.mxu0 0.0
    %252 = vmatprep.subr.mxu0 0.0
    %253 = vmatpush1.msra.mxu0 0.0
    %254 = vmatprep.subr.mxu0 0.0
    %255 = vmatpush1.msra.mxu0 0.0
    %256 = vmatprep.subr.mxu0 0.0
    %257 = vmatpush1.msra.mxu0 0.0
    %258 = vmatprep.subr.mxu0 0.0
    %259 = vmatpush1.msra.mxu0 0.0
    %260 = vmatprep.subr.mxu0 0.0
    %261 = vmatpush1.msra.mxu0 0.0
    %262 = vmatprep.subr.mxu0 0.0
    %263 = vmatpush1.msra.mxu0 0.0
    %264 = vmatprep.subr.mxu0 0.0
    %265 = vmatpush1.msra.mxu0 0.0
    %266 = vmatprep.subr.mxu0 0.0
    %267 = vmatpush1.msra.mxu0 0.0
    %268 = vmatprep.subr.mxu0 0.0
    %269 = vmatpush1.msra.mxu0 0.0
    %270 = vmatprep.mubr.f32.mxu0 0.0
    %271 = vmatmul.mubr.f32.gmra.mrb[0].mxu0 %v195
    %v272 = vpop.f32.mrb[0].mxu0
    %v273 = vadd.f32 0.0, %v272
    %v274 = vpop.f32.mrb[0].mxu0
    %275 = vmatprep.mubr.f32.mxu0 0.0
    %276 = vmatmul.mubr.f32.gmra.mrb[0].mxu0 %v198
    %v277 = vpop.f32.mrb[0].mxu0
    %v278 = vadd.f32 0.0, %v277
    %v279 = vpop.f32.mrb[0].mxu0
    %280 = vmatprep.mubr.f32.mxu0 0.0
    %281 = vmatmul.mubr.f32.gmra.mrb[0].mxu0 %v201
    %v282 = vpop.f32.mrb[0].mxu0
    %v283 = vadd.f32 0.0, %v282
    %v284 = vpop.f32.mrb[0].mxu0
    %285 = vmatprep.mubr.f32.mxu0 0.0
    %286 = vmatmul.mubr.f32.gmra.mrb[0].mxu0 %v204
    %v287 = vpop.f32.mrb[0].mxu0
    %v288 = vadd.f32 0.0, %v287
    %v289 = vpop.f32.mrb[0].mxu0
    %290 = vdwg.mxu0
    %v291 = vld [vmem:[%s4] sm:$0xff]
    %v292 = vld [vmem:[%s4 + $0x8] sm:$0xff]
    %v293 = vld [vmem:[%s4 + $0x10] sm:$0xff]
    %v294 = vld [vmem:[%s4 + $0x18] sm:$0xff]
    %v296 = vsel %vm193, %v291, 0
    %v299 = vsel %vm193, %v292, 0
    %v302 = vsel %vm193, %v293, 0
    %v305 = vsel %vm193, %v294, 0
    %307 = vmatprep.subr.mxu0 0.0
    %308 = vmatpush1.msra.mxu0 %v185
    %309 = vmatprep.subr.mxu0 0.0
    %310 = vmatpush1.msra.mxu0 %v186
    %311 = vmatprep.subr.mxu0 0.0
    %312 = vmatpush1.msra.mxu0 %v187
    %313 = vmatprep.subr.mxu0 0.0
    %314 = vmatpush1.msra.mxu0 %v188
    %315 = vmatprep.subr.mxu0 0.0
    %316 = vmatpush1.msra.mxu0 0.0
    %317 = vmatprep.subr.mxu0 0.0
    %318 = vmatpush1.msra.mxu0 0.0
    %319 = vmatprep.subr.mxu0 0.0
    %320 = vmatpush1.msra.mxu0 0.0
    %321 = vmatprep.subr.mxu0 0.0
    %322 = vmatpush1.msra.mxu0 0.0
    %323 = vmatprep.subr.mxu0 0.0
    %324 = vmatpush1.msra.mxu0 0.0
    %325 = vmatprep.subr.mxu0 0.0
    %326 = vmatpush1.msra.mxu0 0.0
    %327 = vmatprep.subr.mxu0 0.0
    %328 = vmatpush1.msra.mxu0 0.0
    %329 = vmatprep.subr.mxu0 0.0
    %330 = vmatpush1.msra.mxu0 0.0
    %331 = vmatprep.subr.mxu0 0.0
    %332 = vmatpush1.msra.mxu0 0.0
    %333 = vmatprep.subr.mxu0 0.0
    %334 = vmatpush1.msra.mxu0 0.0
    %335 = vmatprep.subr.mxu0 0.0
    %336 = vmatpush1.msra.mxu0 0.0
    %337 = vmatprep.subr.mxu0 0.0
    %338 = vmatpush1.msra.mxu0 0.0
    %339 = vmatprep.subr.mxu0 0.0
    %340 = vmatpush1.msra.mxu0 0.0
    %341 = vmatprep.subr.mxu0 0.0
    %342 = vmatpush1.msra.mxu0 0.0
    %343 = vmatprep.subr.mxu0 0.0
    %344 = vmatpush1.msra.mxu0 0.0
    %345 = vmatprep.subr.mxu0 0.0
    %346 = vmatpush1.msra.mxu0 0.0
    %347 = vmatprep.subr.mxu0 0.0
    %348 = vmatpush1.msra.mxu0 0.0
    %349 = vmatprep.subr.mxu0 0.0
    %350 = vmatpush1.msra.mxu0 0.0
    %351 = vmatprep.subr.mxu0 0.0
    %352 = vmatpush1.msra.mxu0 0.0
    %353 = vmatprep.subr.mxu0 0.0
    %354 = vmatpush1.msra.mxu0 0.0
    %355 = vmatprep.subr.mxu0 0.0
    %356 = vmatpush1.msra.mxu0 0.0
    %357 = vmatprep.subr.mxu0 0.0
    %358 = vmatpush1.msra.mxu0 0.0
    %359 = vmatprep.subr.mxu0 0.0
    %360 = vmatpush1.msra.mxu0 0.0
    %361 = vmatprep.subr.mxu0 0.0
    %362 = vmatpush1.msra.mxu0 0.0
    %363 = vmatprep.subr.mxu0 0.0
    %364 = vmatpush1.msra.mxu0 0.0
    %365 = vmatprep.subr.mxu0 0.0
    %366 = vmatpush1.msra.mxu0 0.0
    %367 = vmatprep.subr.mxu0 0.0
    %368 = vmatpush1.msra.mxu0 0.0
    %369 = vmatprep.subr.mxu0 0.0
    %370 = vmatpush1.msra.mxu0 0.0
    %371 = vmatprep.mubr.f32.mxu0 0.0
    %372 = vmatmul.mubr.f32.gmra.mrb[0].mxu0 %v296
    %v373 = vpop.f32.mrb[0].mxu0
    %v374 = vadd.f32 0.0, %v373
    %v375 = vpop.f32.mrb[0].mxu0
    %376 = vmatprep.mubr.f32.mxu0 0.0
    %377 = vmatmul.mubr.f32.gmra.mrb[0].mxu0 %v299
    %v378 = vpop.f32.mrb[0].mxu0
    %v379 = vadd.f32 0.0, %v378
    %v380 = vpop.f32.mrb[0].mxu0
    %381 = vmatprep.mubr.f32.mxu0 0.0
    %382 = vmatmul.mubr.f32.gmra.mrb[0].mxu0 %v302
    %v383 = vpop.f32.mrb[0].mxu0
    %v384 = vadd.f32 0.0, %v383
    %v385 = vpop.f32.mrb[0].mxu0
    %386 = vmatprep.mubr.f32.mxu0 0.0
    %387 = vmatmul.mubr.f32.gmra.mrb[0].mxu0 %v305
    %v388 = vpop.f32.mrb[0].mxu0
    %v389 = vadd.f32 0.0, %v388
    %v390 = vpop.f32.mrb[0].mxu0
    %391 = vdwg.mxu0
    %v392 = vld [vmem:[%s5] sm:$0xff]
    %v393 = vld [vmem:[%s5 + $0x8] sm:$0xff]
    %v394 = vld [vmem:[%s5 + $0x10] sm:$0xff]
    %v395 = vld [vmem:[%s5 + $0x18] sm:$0xff]
    %v396 = vld [vmem:[%s5 + $0x20] sm:$0xff]
    %v397 = vld [vmem:[%s5 + $0x28] sm:$0xff]
    %v398 = vld [vmem:[%s5 + $0x30] sm:$0xff]
    %v399 = vld [vmem:[%s5 + $0x38] sm:$0xff]
    %s400 = scalar_lea.vmem %s5, 64
    %v401 = vld [vmem:[%s400] sm:$0xff]
    %v402 = vld [vmem:[%s400 + $0x8] sm:$0xff]
    %v403 = vld [vmem:[%s400 + $0x10] sm:$0xff]
    %v404 = vld [vmem:[%s400 + $0x18] sm:$0xff]
    %v405 = vld [vmem:[%s400 + $0x20] sm:$0xff]
    %v406 = vld [vmem:[%s400 + $0x28] sm:$0xff]
    %v407 = vld [vmem:[%s400 + $0x30] sm:$0xff]
    %v408 = vld [vmem:[%s400 + $0x38] sm:$0xff]
    %vm409 = vcmask 523264
    %v411 = vsel %vm409, %v185, 0
    %v414 = vsel %vm409, %v186, 0
    %v417 = vsel %vm409, %v187, 0
    %v420 = vsel %vm409, %v188, 0
    %422 = vmatprep.subr.mxu0 0.0
    %423 = vmatpush1.msra.mxu0 %v401
    %424 = vmatprep.subr.mxu0 0.0
    %425 = vmatpush1.msra.mxu0 %v402
    %426 = vmatprep.subr.mxu0 0.0
    %427 = vmatpush1.msra.mxu0 %v403
    %428 = vmatprep.subr.mxu0 0.0
    %429 = vmatpush1.msra.mxu0 %v404
    %430 = vmatprep.subr.mxu0 0.0
    %431 = vmatpush1.msra.mxu0 %v405
    %432 = vmatprep.subr.mxu0 0.0
    %433 = vmatpush1.msra.mxu0 %v406
    %434 = vmatprep.subr.mxu0 0.0
    %435 = vmatpush1.msra.mxu0 %v407
    %436 = vmatprep.subr.mxu0 0.0
    %437 = vmatpush1.msra.mxu0 %v408
    %438 = vmatprep.subr.mxu0 0.0
    %439 = vmatpush1.msra.mxu0 0.0
    %440 = vmatprep.subr.mxu0 0.0
    %441 = vmatpush1.msra.mxu0 0.0
    %442 = vmatprep.subr.mxu0 0.0
    %443 = vmatpush1.msra.mxu0 0.0
    %444 = vmatprep.subr.mxu0 0.0
    %445 = vmatpush1.msra.mxu0 0.0
    %446 = vmatprep.subr.mxu0 0.0
    %447 = vmatpush1.msra.mxu0 0.0
    %448 = vmatprep.subr.mxu0 0.0
    %449 = vmatpush1.msra.mxu0 0.0
    %450 = vmatprep.subr.mxu0 0.0
    %451 = vmatpush1.msra.mxu0 0.0
    %452 = vmatprep.subr.mxu0 0.0
    %453 = vmatpush1.msra.mxu0 0.0
    %454 = vmatprep.subr.mxu0 0.0
    %455 = vmatpush1.msra.mxu0 0.0
    %456 = vmatprep.subr.mxu0 0.0
    %457 = vmatpush1.msra.mxu0 0.0
    %458 = vmatprep.subr.mxu0 0.0
    %459 = vmatpush1.msra.mxu0 0.0
    %460 = vmatprep.subr.mxu0 0.0
    %461 = vmatpush1.msra.mxu0 0.0
    %462 = vmatprep.subr.mxu0 0.0
    %463 = vmatpush1.msra.mxu0 0.0
    %464 = vmatprep.subr.mxu0 0.0
    %465 = vmatpush1.msra.mxu0 0.0
    %466 = vmatprep.subr.mxu0 0.0
    %467 = vmatpush1.msra.mxu0 0.0
    %468 = vmatprep.subr.mxu0 0.0
    %469 = vmatpush1.msra.mxu0 0.0
    %470 = vmatprep.subr.mxu0 0.0
    %471 = vmatpush1.msra.mxu0 0.0
    %472 = vmatprep.subr.mxu0 0.0
    %473 = vmatpush1.msra.mxu0 0.0
    %474 = vmatprep.subr.mxu0 0.0
    %475 = vmatpush1.msra.mxu0 0.0
    %476 = vmatprep.subr.mxu0 0.0
    %477 = vmatpush1.msra.mxu0 0.0
    %478 = vmatprep.subr.mxu0 0.0
    %479 = vmatpush1.msra.mxu0 0.0
    %480 = vmatprep.subr.mxu0 0.0
    %481 = vmatpush1.msra.mxu0 0.0
    %482 = vmatprep.subr.mxu0 0.0
    %483 = vmatpush1.msra.mxu0 0.0
    %484 = vmatprep.subr.mxu0 0.0
    %485 = vmatpush1.msra.mxu0 0.0
    %486 = vmatprep.mubr.f32.mxu0 0.0
    %487 = vmatmul.mubr.f32.gmra.mrb[0].mxu0 %v411
    %v488 = vpop.f32.mrb[0].mxu0
    %v489 = vadd.f32 0.0, %v488
    %v490 = vpop.f32.mrb[0].mxu0
    %491 = vmatprep.mubr.f32.mxu0 0.0
    %492 = vmatmul.mubr.f32.gmra.mrb[0].mxu0 %v414
    %v493 = vpop.f32.mrb[0].mxu0
    %v494 = vadd.f32 0.0, %v493
    %v495 = vpop.f32.mrb[0].mxu0
    %496 = vmatprep.mubr.f32.mxu0 0.0
    %497 = vmatmul.mubr.f32.gmra.mrb[0].mxu0 %v417
    %v498 = vpop.f32.mrb[0].mxu0
    %v499 = vadd.f32 0.0, %v498
    %v500 = vpop.f32.mrb[0].mxu0
    %501 = vmatprep.mubr.f32.mxu0 0.0
    %502 = vmatmul.mubr.f32.gmra.mrb[0].mxu0 %v420
    %v503 = vpop.f32.mrb[0].mxu0
    %v504 = vadd.f32 0.0, %v503
    %v505 = vpop.f32.mrb[0].mxu0
    %506 = vdwg.mxu0
    %v508 = vsel %vm409, %v273, 0
    %v511 = vsel %vm409, %v278, 0
    %v514 = vsel %vm409, %v283, 0
    %v517 = vsel %vm409, %v288, 0
    %519 = vmatprep.subr.mxu0 0.0
    %520 = vmatpush1.msra.mxu0 %v392
    %521 = vmatprep.subr.mxu0 0.0
    %522 = vmatpush1.msra.mxu0 %v393
    %523 = vmatprep.subr.mxu0 0.0
    %524 = vmatpush1.msra.mxu0 %v394
    %525 = vmatprep.subr.mxu0 0.0
    %526 = vmatpush1.msra.mxu0 %v395
    %527 = vmatprep.subr.mxu0 0.0
    %528 = vmatpush1.msra.mxu0 %v396
    %529 = vmatprep.subr.mxu0 0.0
    %530 = vmatpush1.msra.mxu0 %v397
    %531 = vmatprep.subr.mxu0 0.0
    %532 = vmatpush1.msra.mxu0 %v398
    %533 = vmatprep.subr.mxu0 0.0
    %534 = vmatpush1.msra.mxu0 %v399
    %535 = vmatprep.subr.mxu0 0.0
    %536 = vmatpush1.msra.mxu0 0.0
    %537 = vmatprep.subr.mxu0 0.0
    %538 = vmatpush1.msra.mxu0 0.0
    %539 = vmatprep.subr.mxu0 0.0
    %540 = vmatpush1.msra.mxu0 0.0
    %541 = vmatprep.subr.mxu0 0.0
    %542 = vmatpush1.msra.mxu0 0.0
    %543 = vmatprep.subr.mxu0 0.0
    %544 = vmatpush1.msra.mxu0 0.0
    %545 = vmatprep.subr.mxu0 0.0
    %546 = vmatpush1.msra.mxu0 0.0
    %547 = vmatprep.subr.mxu0 0.0
    %548 = vmatpush1.msra.mxu0 0.0
    %549 = vmatprep.subr.mxu0 0.0
    %550 = vmatpush1.msra.mxu0 0.0
    %551 = vmatprep.subr.mxu0 0.0
    %552 = vmatpush1.msra.mxu0 0.0
    %553 = vmatprep.subr.mxu0 0.0
    %554 = vmatpush1.msra.mxu0 0.0
    %555 = vmatprep.subr.mxu0 0.0
    %556 = vmatpush1.msra.mxu0 0.0
    %557 = vmatprep.subr.mxu0 0.0
    %558 = vmatpush1.msra.mxu0 0.0
    %559 = vmatprep.subr.mxu0 0.0
    %560 = vmatpush1.msra.mxu0 0.0
    %561 = vmatprep.subr.mxu0 0.0
    %562 = vmatpush1.msra.mxu0 0.0
    %563 = vmatprep.subr.mxu0 0.0
    %564 = vmatpush1.msra.mxu0 0.0
    %565 = vmatprep.subr.mxu0 0.0
    %566 = vmatpush1.msra.mxu0 0.0
    %567 = vmatprep.subr.mxu0 0.0
    %568 = vmatpush1.msra.mxu0 0.0
    %569 = vmatprep.subr.mxu0 0.0
    %570 = vmatpush1.msra.mxu0 0.0
    %571 = vmatprep.subr.mxu0 0.0
    %572 = vmatpush1.msra.mxu0 0.0
    %573 = vmatprep.subr.mxu0 0.0
    %574 = vmatpush1.msra.mxu0 0.0
    %575 = vmatprep.subr.mxu0 0.0
    %576 = vmatpush1.msra.mxu0 0.0
    %577 = vmatprep.subr.mxu0 0.0
    %578 = vmatpush1.msra.mxu0 0.0
    %579 = vmatprep.subr.mxu0 0.0
    %580 = vmatpush1.msra.mxu0 0.0
    %581 = vmatprep.subr.mxu0 0.0
    %582 = vmatpush1.msra.mxu0 0.0
    %583 = vmatprep.mubr.f32.mxu0 0.0
    %584 = vmatmul.mubr.f32.gmra.mrb[0].mxu0 %v508
    %v585 = vpop.f32.mrb[0].mxu0
    %v586 = vadd.f32 %v489, %v585
    %v587 = vpop.f32.mrb[0].mxu0
    %588 = vmatprep.mubr.f32.mxu0 0.0
    %589 = vmatmul.mubr.f32.gmra.mrb[0].mxu0 %v511
    %v590 = vpop.f32.mrb[0].mxu0
    %v591 = vadd.f32 %v494, %v590
    %v592 = vpop.f32.mrb[0].mxu0
    %593 = vmatprep.mubr.f32.mxu0 0.0
    %594 = vmatmul.mubr.f32.gmra.mrb[0].mxu0 %v514
    %v595 = vpop.f32.mrb[0].mxu0
    %v596 = vadd.f32 %v499, %v595
    %v597 = vpop.f32.mrb[0].mxu0
    %598 = vmatprep.mubr.f32.mxu0 0.0
    %599 = vmatmul.mubr.f32.gmra.mrb[0].mxu0 %v517
    %v600 = vpop.f32.mrb[0].mxu0
    %v601 = vadd.f32 %v504, %v600
    %v602 = vpop.f32.mrb[0].mxu0
    %603 = vdwg.mxu0
    %s604 = scalar_lea.vmem %s5, 128
    %v605 = vld [vmem:[%s604] sm:$0xff]
    %v606 = vld [vmem:[%s604 + $0x8] sm:$0xff]
    %v607 = vld [vmem:[%s604 + $0x10] sm:$0xff]
    %v608 = vld [vmem:[%s604 + $0x18] sm:$0xff]
    %v609 = vld [vmem:[%s604 + $0x20] sm:$0xff]
    %v610 = vld [vmem:[%s604 + $0x28] sm:$0xff]
    %v611 = vld [vmem:[%s604 + $0x30] sm:$0xff]
    %v612 = vld [vmem:[%s604 + $0x38] sm:$0xff]
    %v614 = vsel %vm409, %v374, 0
    %v617 = vsel %vm409, %v379, 0
    %v620 = vsel %vm409, %v384, 0
    %v623 = vsel %vm409, %v389, 0
    %625 = vmatprep.subr.mxu0 0.0
    %626 = vmatpush1.msra.mxu0 %v605
    %627 = vmatprep.subr.mxu0 0.0
    %628 = vmatpush1.msra.mxu0 %v606
    %629 = vmatprep.subr.mxu0 0.0
    %630 = vmatpush1.msra.mxu0 %v607
    %631 = vmatprep.subr.mxu0 0.0
    %632 = vmatpush1.msra.mxu0 %v608
    %633 = vmatprep.subr.mxu0 0.0
    %634 = vmatpush1.msra.mxu0 %v609
    %635 = vmatprep.subr.mxu0 0.0
    %636 = vmatpush1.msra.mxu0 %v610
    %637 = vmatprep.subr.mxu0 0.0
    %638 = vmatpush1.msra.mxu0 %v611
    %639 = vmatprep.subr.mxu0 0.0
    %640 = vmatpush1.msra.mxu0 %v612
    %641 = vmatprep.subr.mxu0 0.0
    %642 = vmatpush1.msra.mxu0 0.0
    %643 = vmatprep.subr.mxu0 0.0
    %644 = vmatpush1.msra.mxu0 0.0
    %645 = vmatprep.subr.mxu0 0.0
    %646 = vmatpush1.msra.mxu0 0.0
    %647 = vmatprep.subr.mxu0 0.0
    %648 = vmatpush1.msra.mxu0 0.0
    %649 = vmatprep.subr.mxu0 0.0
    %650 = vmatpush1.msra.mxu0 0.0
    %651 = vmatprep.subr.mxu0 0.0
    %652 = vmatpush1.msra.mxu0 0.0
    %653 = vmatprep.subr.mxu0 0.0
    %654 = vmatpush1.msra.mxu0 0.0
    %655 = vmatprep.subr.mxu0 0.0
    %656 = vmatpush1.msra.mxu0 0.0
    %657 = vmatprep.subr.mxu0 0.0
    %658 = vmatpush1.msra.mxu0 0.0
    %659 = vmatprep.subr.mxu0 0.0
    %660 = vmatpush1.msra.mxu0 0.0
    %661 = vmatprep.subr.mxu0 0.0
    %662 = vmatpush1.msra.mxu0 0.0
    %663 = vmatprep.subr.mxu0 0.0
    %664 = vmatpush1.msra.mxu0 0.0
    %665 = vmatprep.subr.mxu0 0.0
    %666 = vmatpush1.msra.mxu0 0.0
    %667 = vmatprep.subr.mxu0 0.0
    %668 = vmatpush1.msra.mxu0 0.0
    %669 = vmatprep.subr.mxu0 0.0
    %670 = vmatpush1.msra.mxu0 0.0
    %671 = vmatprep.subr.mxu0 0.0
    %672 = vmatpush1.msra.mxu0 0.0
    %673 = vmatprep.subr.mxu0 0.0
    %674 = vmatpush1.msra.mxu0 0.0
    %675 = vmatprep.subr.mxu0 0.0
    %676 = vmatpush1.msra.mxu0 0.0
    %677 = vmatprep.subr.mxu0 0.0
    %678 = vmatpush1.msra.mxu0 0.0
    %679 = vmatprep.subr.mxu0 0.0
    %680 = vmatpush1.msra.mxu0 0.0
    %681 = vmatprep.subr.mxu0 0.0
    %682 = vmatpush1.msra.mxu0 0.0
    %683 = vmatprep.subr.mxu0 0.0
    %684 = vmatpush1.msra.mxu0 0.0
    %685 = vmatprep.subr.mxu0 0.0
    %686 = vmatpush1.msra.mxu0 0.0
    %687 = vmatprep.subr.mxu0 0.0
    %688 = vmatpush1.msra.mxu0 0.0
    %689 = vmatprep.mubr.f32.mxu0 0.0
    %690 = vmatmul.mubr.f32.gmra.mrb[0].mxu0 %v614
    %v691 = vpop.f32.mrb[0].mxu0
    %v692 = vadd.f32 0.0, %v691
    %v693 = vpop.f32.mrb[0].mxu0
    %694 = vmatprep.mubr.f32.mxu0 0.0
    %695 = vmatmul.mubr.f32.gmra.mrb[0].mxu0 %v617
    %v696 = vpop.f32.mrb[0].mxu0
    %v697 = vadd.f32 0.0, %v696
    %v698 = vpop.f32.mrb[0].mxu0
    %699 = vmatprep.mubr.f32.mxu0 0.0
    %700 = vmatmul.mubr.f32.gmra.mrb[0].mxu0 %v620
    %v701 = vpop.f32.mrb[0].mxu0
    %v702 = vadd.f32 0.0, %v701
    %v703 = vpop.f32.mrb[0].mxu0
    %704 = vmatprep.mubr.f32.mxu0 0.0
    %705 = vmatmul.mubr.f32.gmra.mrb[0].mxu0 %v623
    %v706 = vpop.f32.mrb[0].mxu0
    %v707 = vadd.f32 0.0, %v706
    %v708 = vpop.f32.mrb[0].mxu0
    %709 = vdwg.mxu0
    %v710 = vadd.f32 %v586, %v692
    %v711 = vadd.f32 %v591, %v697
    %v712 = vadd.f32 %v596, %v702
    %v713 = vadd.f32 %v601, %v707
    %v714 = vld [vmem:[%s6] sm:$0x1]
    %v716 = vlaneseq
    %v717 = vshrl.u32 %v716, 7
    %v718 = vsub.s32 0, %v717
    %v719 = vrot.slane %v714, %v718
    %v721 = vadd.f32 %v710, %v719
    %v722 = vadd.f32 %v711, %v719
    %v723 = vadd.f32 %v712, %v719
    %v724 = vadd.f32 %v713, %v719
    %vm725 = vcmp.ge.f32.partialorder %v721, 0.0
    %vm726 = vcmp.ge.f32.partialorder %v722, 0.0
    %vm727 = vcmp.ge.f32.partialorder %v723, 0.0
    %vm728 = vcmp.ge.f32.partialorder %v724, 0.0
    %v729 = vmul.f32 %v721, 0.01
    %v730 = vmul.f32 %v722, 0.01
    %v731 = vmul.f32 %v723, 0.01
    %v732 = vmul.f32 %v724, 0.01
    %v733 = vsel %vm725, %v721, %v729
    %v734 = vsel %vm726, %v722, %v730
    %v735 = vsel %vm727, %v723, %v731
    %v736 = vsel %vm728, %v724, %v732
    %v737 = vld [vmem:[%s7] sm:$0xff]
    %v738 = vld [vmem:[%s7 + $0x8] sm:$0xff]
    %v739 = vld [vmem:[%s7 + $0x10] sm:$0xff]
    %v740 = vld [vmem:[%s7 + $0x18] sm:$0xff]
    %v741 = vld [vmem:[%s7 + $0x20] sm:$0xff]
    %v742 = vld [vmem:[%s7 + $0x28] sm:$0xff]
    %v743 = vld [vmem:[%s7 + $0x30] sm:$0xff]
    %v744 = vld [vmem:[%s7 + $0x38] sm:$0xff]
    %v745 = vld [vmem:[%s7 + $0x40] sm:$0xff]
    %v746 = vld [vmem:[%s7 + $0x48] sm:$0xff]
    %v747 = vld [vmem:[%s7 + $0x50] sm:$0xff]
    %v748 = vld [vmem:[%s7 + $0x58] sm:$0xff]
    %v749 = vld [vmem:[%s7 + $0x60] sm:$0xff]
    %v750 = vld [vmem:[%s7 + $0x68] sm:$0xff]
    %v751 = vld [vmem:[%s7 + $0x70] sm:$0xff]
    %v752 = vld [vmem:[%s7 + $0x78] sm:$0xff]
    %v753 = vld [vmem:[%s8] sm:$0x3]
    %v755 = vlaneseq
    %v756 = vshrl.u32 %v755, 7
    %v757 = vsub.s32 0, %v756
    %v758 = vrot.slane %v753, %v757
    %v759 = vlaneseq
    %v760 = vshrl.u32 %v759, 7
    %v761 = vsub.s32 1, %v760
    %v762 = vrot.slane %v753, %v761
    %v766 = vsel %vm409, %v733, 0
    %v769 = vsel %vm409, %v734, 0
    %v772 = vsel %vm409, %v735, 0
    %v775 = vsel %vm409, %v736, 0
    %777 = vmatprep.subr.mxu0 %v738
    %778 = vmatpush1.msra.mxu0 %v737
    %779 = vmatprep.subr.mxu0 %v740
    %780 = vmatpush1.msra.mxu0 %v739
    %781 = vmatprep.subr.mxu0 %v742
    %782 = vmatpush1.msra.mxu0 %v741
    %783 = vmatprep.subr.mxu0 %v744
    %784 = vmatpush1.msra.mxu0 %v743
    %785 = vmatprep.subr.mxu0 %v746
    %786 = vmatpush1.msra.mxu0 %v745
    %787 = vmatprep.subr.mxu0 %v748
    %788 = vmatpush1.msra.mxu0 %v747
    %789 = vmatprep.subr.mxu0 %v750
    %790 = vmatpush1.msra.mxu0 %v749
    %791 = vmatprep.subr.mxu0 %v752
    %792 = vmatpush1.msra.mxu0 %v751
    %793 = vmatprep.subr.mxu0 0.0
    %794 = vmatpush1.msra.mxu0 0.0
    %795 = vmatprep.subr.mxu0 0.0
    %796 = vmatpush1.msra.mxu0 0.0
    %797 = vmatprep.subr.mxu0 0.0
    %798 = vmatpush1.msra.mxu0 0.0
    %799 = vmatprep.subr.mxu0 0.0
    %800 = vmatpush1.msra.mxu0 0.0
    %801 = vmatprep.subr.mxu0 0.0
    %802 = vmatpush1.msra.mxu0 0.0
    %803 = vmatprep.subr.mxu0 0.0
    %804 = vmatpush1.msra.mxu0 0.0
    %805 = vmatprep.subr.mxu0 0.0
    %806 = vmatpush1.msra.mxu0 0.0
    %807 = vmatprep.subr.mxu0 0.0
    %808 = vmatpush1.msra.mxu0 0.0
    %809 = vmatprep.subr.mxu0 0.0
    %810 = vmatpush1.msra.mxu0 0.0
    %811 = vmatprep.subr.mxu0 0.0
    %812 = vmatpush1.msra.mxu0 0.0
    %813 = vmatprep.subr.mxu0 0.0
    %814 = vmatpush1.msra.mxu0 0.0
    %815 = vmatprep.subr.mxu0 0.0
    %816 = vmatpush1.msra.mxu0 0.0
    %817 = vmatprep.subr.mxu0 0.0
    %818 = vmatpush1.msra.mxu0 0.0
    %819 = vmatprep.subr.mxu0 0.0
    %820 = vmatpush1.msra.mxu0 0.0
    %821 = vmatprep.subr.mxu0 0.0
    %822 = vmatpush1.msra.mxu0 0.0
    %823 = vmatprep.subr.mxu0 0.0
    %824 = vmatpush1.msra.mxu0 0.0
    %825 = vmatprep.subr.mxu0 0.0
    %826 = vmatpush1.msra.mxu0 0.0
    %827 = vmatprep.subr.mxu0 0.0
    %828 = vmatpush1.msra.mxu0 0.0
    %829 = vmatprep.subr.mxu0 0.0
    %830 = vmatpush1.msra.mxu0 0.0
    %831 = vmatprep.subr.mxu0 0.0
    %832 = vmatpush1.msra.mxu0 0.0
    %833 = vmatprep.subr.mxu0 0.0
    %834 = vmatpush1.msra.mxu0 0.0
    %835 = vmatprep.subr.mxu0 0.0
    %836 = vmatpush1.msra.mxu0 0.0
    %837 = vmatprep.subr.mxu0 0.0
    %838 = vmatpush1.msra.mxu0 0.0
    %839 = vmatprep.subr.mxu0 0.0
    %840 = vmatpush1.msra.mxu0 0.0
    %841 = vmatprep.mubr.f32.mxu0 0.0
    %842 = vmatmul.mubr.f32.gmra.mrb[0].mxu0 %v766
    %v843 = vpop.f32.mrb[0].mxu0
    %v844 = vadd.f32 %v758, %v843
    %v845 = vpop.f32.mrb[0].mxu0
    %v846 = vadd.f32 %v762, %v845
    %847 = vmatprep.mubr.f32.mxu0 0.0
    %848 = vmatmul.mubr.f32.gmra.mrb[0].mxu0 %v769
    %v849 = vpop.f32.mrb[0].mxu0
    %v850 = vadd.f32 %v758, %v849
    %v851 = vpop.f32.mrb[0].mxu0
    %v852 = vadd.f32 %v762, %v851
    %853 = vmatprep.mubr.f32.mxu0 0.0
    %854 = vmatmul.mubr.f32.gmra.mrb[0].mxu0 %v772
    %v855 = vpop.f32.mrb[0].mxu0
    %v856 = vadd.f32 %v758, %v855
    %v857 = vpop.f32.mrb[0].mxu0
    %v858 = vadd.f32 %v762, %v857
    %859 = vmatprep.mubr.f32.mxu0 0.0
    %860 = vmatmul.mubr.f32.gmra.mrb[0].mxu0 %v775
    %v861 = vpop.f32.mrb[0].mxu0
    %v862 = vadd.f32 %v758, %v861
    %v863 = vpop.f32.mrb[0].mxu0
    %v864 = vadd.f32 %v762, %v863
    %865 = vdwg.mxu0
    %v866 = vadd.f32 %v844, %v45
    %v867 = vadd.f32 %v846, %v46
    %v868 = vadd.f32 %v850, %v47
    %v869 = vadd.f32 %v852, %v48
    %v870 = vadd.f32 %v856, %v49
    %v871 = vadd.f32 %v858, %v50
    %v872 = vadd.f32 %v862, %v51
    %v873 = vadd.f32 %v864, %v52
    %v874 = vadd.f32 %v866, %v868
    %v875 = vadd.f32 %v874, %v870
    %v876 = vadd.f32 %v875, %v872
    %v877 = vrot.slane %v876, 4
    %v878 = vadd.f32 %v876, %v877
    %v879 = vrot.slane %v878, 2
    %v880 = vadd.f32 %v878, %v879
    %v881 = vrot.slane %v880, 1
    %v882 = vadd.f32 %v880, %v881
    %v883 = vadd.f32 %v867, %v869
    %v884 = vadd.f32 %v883, %v871
    %v885 = vadd.f32 %v884, %v873
    %v886 = vrot.slane %v885, 4
    %v887 = vadd.f32 %v885, %v886
    %v888 = vrot.slane %v887, 2
    %v889 = vadd.f32 %v887, %v888
    %v890 = vrot.slane %v889, 1
    %v891 = vadd.f32 %v889, %v890
    %v892 = vmul.f32 %v866, %v866
    %v893 = vmul.f32 %v867, %v867
    %v894 = vmul.f32 %v868, %v868
    %v895 = vmul.f32 %v869, %v869
    %v896 = vmul.f32 %v870, %v870
    %v897 = vmul.f32 %v871, %v871
    %v898 = vmul.f32 %v872, %v872
    %v899 = vmul.f32 %v873, %v873
    %v900 = vadd.f32 %v892, %v894
    %v901 = vadd.f32 %v900, %v896
    %v902 = vadd.f32 %v901, %v898
    %v903 = vrot.slane %v902, 4
    %v904 = vadd.f32 %v902, %v903
    %v905 = vrot.slane %v904, 2
    %v906 = vadd.f32 %v904, %v905
    %v907 = vrot.slane %v906, 1
    %v908 = vadd.f32 %v906, %v907
    %v909 = vadd.f32 %v893, %v895
    %v910 = vadd.f32 %v909, %v897
    %v911 = vadd.f32 %v910, %v899
    %v912 = vrot.slane %v911, 4
    %v913 = vadd.f32 %v911, %v912
    %v914 = vrot.slane %v913, 2
    %v915 = vadd.f32 %v913, %v914
    %v916 = vrot.slane %v915, 1
    %v917 = vadd.f32 %v915, %v916
    %v918 = vld [vmem:[%s11] sm:$0xff]
    %v919 = vld [vmem:[%s11 + $0x8] sm:$0xff]
    %v920 = vld [vmem:[%s11 + $0x10] sm:$0xff]
    %v921 = vld [vmem:[%s11 + $0x18] sm:$0xff]
    %v922 = vld [vmem:[%s11 + $0x20] sm:$0xff]
    %v923 = vld [vmem:[%s11 + $0x28] sm:$0xff]
    %v924 = vld [vmem:[%s11 + $0x30] sm:$0xff]
    %v925 = vld [vmem:[%s11 + $0x38] sm:$0xff]
    %v926 = vld [vmem:[%s11 + $0x40] sm:$0xff]
    %v927 = vld [vmem:[%s11 + $0x48] sm:$0xff]
    %v928 = vld [vmem:[%s11 + $0x50] sm:$0xff]
    %v929 = vld [vmem:[%s11 + $0x58] sm:$0xff]
    %v930 = vld [vmem:[%s11 + $0x60] sm:$0xff]
    %v931 = vld [vmem:[%s11 + $0x68] sm:$0xff]
    %v932 = vld [vmem:[%s11 + $0x70] sm:$0xff]
    %v933 = vld [vmem:[%s11 + $0x78] sm:$0xff]
    %v934 = vld [vmem:[%s11 + $0x80] sm:$0xff]
    %v935 = vld [vmem:[%s11 + $0x88] sm:$0xff]
    %v936 = vld [vmem:[%s11 + $0x90] sm:$0xff]
    %v937 = vld [vmem:[%s11 + $0x98] sm:$0xff]
    %v938 = vld [vmem:[%s11 + $0xa0] sm:$0xff]
    %v939 = vld [vmem:[%s11 + $0xa8] sm:$0xff]
    %v940 = vld [vmem:[%s11 + $0xb0] sm:$0xff]
    %v941 = vld [vmem:[%s11 + $0xb8] sm:$0xff]
    %v942 = vld [vmem:[%s11 + $0xc0] sm:$0xff]
    %v943 = vld [vmem:[%s11 + $0xc8] sm:$0xff]
    %v944 = vld [vmem:[%s11 + $0xd0] sm:$0xff]
    %v945 = vld [vmem:[%s11 + $0xd8] sm:$0xff]
    %v946 = vld [vmem:[%s11 + $0xe0] sm:$0xff]
    %v947 = vld [vmem:[%s11 + $0xe8] sm:$0xff]
    %v948 = vld [vmem:[%s11 + $0xf0] sm:$0xff]
    %v949 = vld [vmem:[%s11 + $0xf8] sm:$0xff]
    %950 = vmatprep.subr.mxu0 0.0
    %951 = vmatpush1.msra.mxu0 %v918
    %952 = vmatprep.subr.mxu0 0.0
    %953 = vmatpush1.msra.mxu0 %v919
    %954 = vmatprep.subr.mxu0 0.0
    %955 = vmatpush1.msra.mxu0 %v920
    %956 = vmatprep.subr.mxu0 0.0
    %957 = vmatpush1.msra.mxu0 %v921
    %958 = vmatprep.subr.mxu0 0.0
    %959 = vmatpush1.msra.mxu0 %v922
    %960 = vmatprep.subr.mxu0 0.0
    %961 = vmatpush1.msra.mxu0 %v923
    %962 = vmatprep.subr.mxu0 0.0
    %963 = vmatpush1.msra.mxu0 %v924
    %964 = vmatprep.subr.mxu0 0.0
    %965 = vmatpush1.msra.mxu0 %v925
    %966 = vmatprep.subr.mxu0 0.0
    %967 = vmatpush1.msra.mxu0 %v926
    %968 = vmatprep.subr.mxu0 0.0
    %969 = vmatpush1.msra.mxu0 %v927
    %970 = vmatprep.subr.mxu0 0.0
    %971 = vmatpush1.msra.mxu0 %v928
    %972 = vmatprep.subr.mxu0 0.0
    %973 = vmatpush1.msra.mxu0 %v929
    %974 = vmatprep.subr.mxu0 0.0
    %975 = vmatpush1.msra.mxu0 %v930
    %976 = vmatprep.subr.mxu0 0.0
    %977 = vmatpush1.msra.mxu0 %v931
    %978 = vmatprep.subr.mxu0 0.0
    %979 = vmatpush1.msra.mxu0 %v932
    %980 = vmatprep.subr.mxu0 0.0
    %981 = vmatpush1.msra.mxu0 %v933
    %982 = vmatprep.subr.mxu0 0.0
    %983 = vmatpush1.msra.mxu0 %v934
    %984 = vmatprep.subr.mxu0 0.0
    %985 = vmatpush1.msra.mxu0 %v935
    %986 = vmatprep.subr.mxu0 0.0
    %987 = vmatpush1.msra.mxu0 %v936
    %988 = vmatprep.subr.mxu0 0.0
    %989 = vmatpush1.msra.mxu0 %v937
    %990 = vmatprep.subr.mxu0 0.0
    %991 = vmatpush1.msra.mxu0 %v938
    %992 = vmatprep.subr.mxu0 0.0
    %993 = vmatpush1.msra.mxu0 %v939
    %994 = vmatprep.subr.mxu0 0.0
    %995 = vmatpush1.msra.mxu0 %v940
    %996 = vmatprep.subr.mxu0 0.0
    %997 = vmatpush1.msra.mxu0 %v941
    %998 = vmatprep.subr.mxu0 0.0
    %999 = vmatpush1.msra.mxu0 %v942
    %1000 = vmatprep.subr.mxu0 0.0
    %1001 = vmatpush1.msra.mxu0 %v943
    %1002 = vmatprep.subr.mxu0 0.0
    %1003 = vmatpush1.msra.mxu0 %v944
    %1004 = vmatprep.subr.mxu0 0.0
    %1005 = vmatpush1.msra.mxu0 %v945
    %1006 = vmatprep.subr.mxu0 0.0
    %1007 = vmatpush1.msra.mxu0 %v946
    %1008 = vmatprep.subr.mxu0 0.0
    %1009 = vmatpush1.msra.mxu0 %v947
    %1010 = vmatprep.subr.mxu0 0.0
    %1011 = vmatpush1.msra.mxu0 %v948
    %1012 = vmatprep.subr.mxu0 0.0
    %1013 = vmatpush1.msra.mxu0 %v949
    %1014 = vmatprep.mubr.f32.mxu0 %v891
    %1015 = vmatmul.mubr.f32.gmra.mrb[0].mxu0 %v882
    %v1016 = vpop.f32.mrb[0].mxu0
    %v1017 = vadd.f32 0.0, %v1016
    %v1018 = vpop.f32.mrb[0].mxu0
    %1019 = vdwg.mxu0
    %1020 = vmatprep.subr.mxu0 0.0
    %1021 = vmatpush1.msra.mxu0 %v918
    %1022 = vmatprep.subr.mxu0 0.0
    %1023 = vmatpush1.msra.mxu0 %v919
    %1024 = vmatprep.subr.mxu0 0.0
    %1025 = vmatpush1.msra.mxu0 %v920
    %1026 = vmatprep.subr.mxu0 0.0
    %1027 = vmatpush1.msra.mxu0 %v921
    %1028 = vmatprep.subr.mxu0 0.0
    %1029 = vmatpush1.msra.mxu0 %v922
    %1030 = vmatprep.subr.mxu0 0.0
    %1031 = vmatpush1.msra.mxu0 %v923
    %1032 = vmatprep.subr.mxu0 0.0
    %1033 = vmatpush1.msra.mxu0 %v924
    %1034 = vmatprep.subr.mxu0 0.0
    %1035 = vmatpush1.msra.mxu0 %v925
    %1036 = vmatprep.subr.mxu0 0.0
    %1037 = vmatpush1.msra.mxu0 %v926
    %1038 = vmatprep.subr.mxu0 0.0
    %1039 = vmatpush1.msra.mxu0 %v927
    %1040 = vmatprep.subr.mxu0 0.0
    %1041 = vmatpush1.msra.mxu0 %v928
    %1042 = vmatprep.subr.mxu0 0.0
    %1043 = vmatpush1.msra.mxu0 %v929
    %1044 = vmatprep.subr.mxu0 0.0
    %1045 = vmatpush1.msra.mxu0 %v930
    %1046 = vmatprep.subr.mxu0 0.0
    %1047 = vmatpush1.msra.mxu0 %v931
    %1048 = vmatprep.subr.mxu0 0.0
    %1049 = vmatpush1.msra.mxu0 %v932
    %1050 = vmatprep.subr.mxu0 0.0
    %1051 = vmatpush1.msra.mxu0 %v933
    %1052 = vmatprep.subr.mxu0 0.0
    %1053 = vmatpush1.msra.mxu0 %v934
    %1054 = vmatprep.subr.mxu0 0.0
    %1055 = vmatpush1.msra.mxu0 %v935
    %1056 = vmatprep.subr.mxu0 0.0
    %1057 = vmatpush1.msra.mxu0 %v936
    %1058 = vmatprep.subr.mxu0 0.0
    %1059 = vmatpush1.msra.mxu0 %v937
    %1060 = vmatprep.subr.mxu0 0.0
    %1061 = vmatpush1.msra.mxu0 %v938
    %1062 = vmatprep.subr.mxu0 0.0
    %1063 = vmatpush1.msra.mxu0 %v939
    %1064 = vmatprep.subr.mxu0 0.0
    %1065 = vmatpush1.msra.mxu0 %v940
    %1066 = vmatprep.subr.mxu0 0.0
    %1067 = vmatpush1.msra.mxu0 %v941
    %1068 = vmatprep.subr.mxu0 0.0
    %1069 = vmatpush1.msra.mxu0 %v942
    %1070 = vmatprep.subr.mxu0 0.0
    %1071 = vmatpush1.msra.mxu0 %v943
    %1072 = vmatprep.subr.mxu0 0.0
    %1073 = vmatpush1.msra.mxu0 %v944
    %1074 = vmatprep.subr.mxu0 0.0
    %1075 = vmatpush1.msra.mxu0 %v945
    %1076 = vmatprep.subr.mxu0 0.0
    %1077 = vmatpush1.msra.mxu0 %v946
    %1078 = vmatprep.subr.mxu0 0.0
    %1079 = vmatpush1.msra.mxu0 %v947
    %1080 = vmatprep.subr.mxu0 0.0
    %1081 = vmatpush1.msra.mxu0 %v948
    %1082 = vmatprep.subr.mxu0 0.0
    %1083 = vmatpush1.msra.mxu0 %v949
    %1084 = vmatprep.mubr.f32.mxu0 %v917
    %1085 = vmatmul.mubr.f32.gmra.mrb[0].mxu0 %v908
    %v1086 = vpop.f32.mrb[0].mxu0
    %v1087 = vadd.f32 0.0, %v1086
    %v1088 = vpop.f32.mrb[0].mxu0
    %1089 = vdwg.mxu0
    %v1090 = vmul.f32 %v1017, 0.001953125
    %v1091 = vmul.f32 %v1087, 0.001953125
    %v1092 = vmul.f32 %v1090, %v1090
    %v1093 = vsub.f32 %v1091, %v1092
    %v1094 = vadd.f32 %v1093, 1e-05
    %v1095 = vrsqrt.pop %v1094
    %v1096 = vld [vmem:[%s9] sm:$0x1]
    %v1097 = vmul.f32 %v1096, %v1095
    %v1098 = vld [vmem:[%s10] sm:$0x1]
    %v1099 = vmul.f32 %v1090, %v1097
    %v1100 = vsub.f32 %v1098, %v1099
    %v1101 = vld [vmem:[%s12] sm:$0xff]
    %v1102 = vld [vmem:[%s12 + $0x8] sm:$0xff]
    %v1103 = vld [vmem:[%s12 + $0x10] sm:$0xff]
    %v1104 = vld [vmem:[%s12 + $0x18] sm:$0xff]
    %vm1105 = vcmask 130048
    %v1107 = vsel %vm1105, %v1097, 0
    %1109 = vmatprep.subr.mxu0 %v1102
    %1110 = vmatpush1.msra.mxu0 %v1101
    %1111 = vmatprep.subr.mxu0 %v1104
    %1112 = vmatpush1.msra.mxu0 %v1103
    %1113 = vmatprep.subr.mxu0 0.0
    %1114 = vmatpush1.msra.mxu0 0.0
    %1115 = vmatprep.subr.mxu0 0.0
    %1116 = vmatpush1.msra.mxu0 0.0
    %1117 = vmatprep.subr.mxu0 0.0
    %1118 = vmatpush1.msra.mxu0 0.0
    %1119 = vmatprep.subr.mxu0 0.0
    %1120 = vmatpush1.msra.mxu0 0.0
    %1121 = vmatprep.subr.mxu0 0.0
    %1122 = vmatpush1.msra.mxu0 0.0
    %1123 = vmatprep.subr.mxu0 0.0
    %1124 = vmatpush1.msra.mxu0 0.0
    %1125 = vmatprep.subr.mxu0 0.0
    %1126 = vmatpush1.msra.mxu0 0.0
    %1127 = vmatprep.subr.mxu0 0.0
    %1128 = vmatpush1.msra.mxu0 0.0
    %1129 = vmatprep.subr.mxu0 0.0
    %1130 = vmatpush1.msra.mxu0 0.0
    %1131 = vmatprep.subr.mxu0 0.0
    %1132 = vmatpush1.msra.mxu0 0.0
    %1133 = vmatprep.subr.mxu0 0.0
    %1134 = vmatpush1.msra.mxu0 0.0
    %1135 = vmatprep.subr.mxu0 0.0
    %1136 = vmatpush1.msra.mxu0 0.0
    %1137 = vmatprep.subr.mxu0 0.0
    %1138 = vmatpush1.msra.mxu0 0.0
    %1139 = vmatprep.subr.mxu0 0.0
    %1140 = vmatpush1.msra.mxu0 0.0
    %1141 = vmatprep.subr.mxu0 0.0
    %1142 = vmatpush1.msra.mxu0 0.0
    %1143 = vmatprep.subr.mxu0 0.0
    %1144 = vmatpush1.msra.mxu0 0.0
    %1145 = vmatprep.subr.mxu0 0.0
    %1146 = vmatpush1.msra.mxu0 0.0
    %1147 = vmatprep.subr.mxu0 0.0
    %1148 = vmatpush1.msra.mxu0 0.0
    %1149 = vmatprep.subr.mxu0 0.0
    %1150 = vmatpush1.msra.mxu0 0.0
    %1151 = vmatprep.subr.mxu0 0.0
    %1152 = vmatpush1.msra.mxu0 0.0
    %1153 = vmatprep.subr.mxu0 0.0
    %1154 = vmatpush1.msra.mxu0 0.0
    %1155 = vmatprep.subr.mxu0 0.0
    %1156 = vmatpush1.msra.mxu0 0.0
    %1157 = vmatprep.subr.mxu0 0.0
    %1158 = vmatpush1.msra.mxu0 0.0
    %1159 = vmatprep.subr.mxu0 0.0
    %1160 = vmatpush1.msra.mxu0 0.0
    %1161 = vmatprep.subr.mxu0 0.0
    %1162 = vmatpush1.msra.mxu0 0.0
    %1163 = vmatprep.subr.mxu0 0.0
    %1164 = vmatpush1.msra.mxu0 0.0
    %1165 = vmatprep.subr.mxu0 0.0
    %1166 = vmatpush1.msra.mxu0 0.0
    %1167 = vmatprep.subr.mxu0 0.0
    %1168 = vmatpush1.msra.mxu0 0.0
    %1169 = vmatprep.subr.mxu0 0.0
    %1170 = vmatpush1.msra.mxu0 0.0
    %1171 = vmatprep.subr.mxu0 0.0
    %1172 = vmatpush1.msra.mxu0 0.0
    %1173 = vmatprep.mubr.f32.mxu0 0.0
    %1174 = vmatmul.mubr.f32.gmra.mrb[0].mxu0 %v1107
    %v1175 = vpop.f32.mrb[0].mxu0
    %v1176 = vadd.f32 0.0, %v1175
    %v1177 = vpop.f32.mrb[0].mxu0
    %v1178 = vadd.f32 0.0, %v1177
    %1179 = vdwg.mxu0
    %v1181 = vsel %vm1105, %v1100, 0
    %1183 = vmatprep.subr.mxu0 %v1102
    %1184 = vmatpush1.msra.mxu0 %v1101
    %1185 = vmatprep.subr.mxu0 %v1104
    %1186 = vmatpush1.msra.mxu0 %v1103
    %1187 = vmatprep.subr.mxu0 0.0
    %1188 = vmatpush1.msra.mxu0 0.0
    %1189 = vmatprep.subr.mxu0 0.0
    %1190 = vmatpush1.msra.mxu0 0.0
    %1191 = vmatprep.subr.mxu0 0.0
    %1192 = vmatpush1.msra.mxu0 0.0
    %1193 = vmatprep.subr.mxu0 0.0
    %1194 = vmatpush1.msra.mxu0 0.0
    %1195 = vmatprep.subr.mxu0 0.0
    %1196 = vmatpush1.msra.mxu0 0.0
    %1197 = vmatprep.subr.mxu0 0.0
    %1198 = vmatpush1.msra.mxu0 0.0
    %1199 = vmatprep.subr.mxu0 0.0
    %1200 = vmatpush1.msra.mxu0 0.0
    %1201 = vmatprep.subr.mxu0 0.0
    %1202 = vmatpush1.msra.mxu0 0.0
    %1203 = vmatprep.subr.mxu0 0.0
    %1204 = vmatpush1.msra.mxu0 0.0
    %1205 = vmatprep.subr.mxu0 0.0
    %1206 = vmatpush1.msra.mxu0 0.0
    %1207 = vmatprep.subr.mxu0 0.0
    %1208 = vmatpush1.msra.mxu0 0.0
    %1209 = vmatprep.subr.mxu0 0.0
    %1210 = vmatpush1.msra.mxu0 0.0
    %1211 = vmatprep.subr.mxu0 0.0
    %1212 = vmatpush1.msra.mxu0 0.0
    %1213 = vmatprep.subr.mxu0 0.0
    %1214 = vmatpush1.msra.mxu0 0.0
    %1215 = vmatprep.subr.mxu0 0.0
    %1216 = vmatpush1.msra.mxu0 0.0
    %1217 = vmatprep.subr.mxu0 0.0
    %1218 = vmatpush1.msra.mxu0 0.0
    %1219 = vmatprep.subr.mxu0 0.0
    %1220 = vmatpush1.msra.mxu0 0.0
    %1221 = vmatprep.subr.mxu0 0.0
    %1222 = vmatpush1.msra.mxu0 0.0
    %1223 = vmatprep.subr.mxu0 0.0
    %1224 = vmatpush1.msra.mxu0 0.0
    %1225 = vmatprep.subr.mxu0 0.0
    %1226 = vmatpush1.msra.mxu0 0.0
    %1227 = vmatprep.subr.mxu0 0.0
    %1228 = vmatpush1.msra.mxu0 0.0
    %1229 = vmatprep.subr.mxu0 0.0
    %1230 = vmatpush1.msra.mxu0 0.0
    %1231 = vmatprep.subr.mxu0 0.0
    %1232 = vmatpush1.msra.mxu0 0.0
    %1233 = vmatprep.subr.mxu0 0.0
    %1234 = vmatpush1.msra.mxu0 0.0
    %1235 = vmatprep.subr.mxu0 0.0
    %1236 = vmatpush1.msra.mxu0 0.0
    %1237 = vmatprep.subr.mxu0 0.0
    %1238 = vmatpush1.msra.mxu0 0.0
    %1239 = vmatprep.subr.mxu0 0.0
    %1240 = vmatpush1.msra.mxu0 0.0
    %1241 = vmatprep.subr.mxu0 0.0
    %1242 = vmatpush1.msra.mxu0 0.0
    %1243 = vmatprep.subr.mxu0 0.0
    %1244 = vmatpush1.msra.mxu0 0.0
    %1245 = vmatprep.subr.mxu0 0.0
    %1246 = vmatpush1.msra.mxu0 0.0
    %1247 = vmatprep.mubr.f32.mxu0 0.0
    %1248 = vmatmul.mubr.f32.gmra.mrb[0].mxu0 %v1181
    %v1249 = vpop.f32.mrb[0].mxu0
    %v1250 = vadd.f32 0.0, %v1249
    %v1251 = vpop.f32.mrb[0].mxu0
    %v1252 = vadd.f32 0.0, %v1251
    %1253 = vdwg.mxu0
    %v1254 = vlaneseq
    %v1255 = vshrl.u32 %v1254, 7
    %v1256 = vsub.s32 0, %v1255
    %v1257 = vrot.slane %v1176, %v1256
    %v1258 = vlaneseq
    %v1259 = vshrl.u32 %v1258, 7
    %v1260 = vsub.s32 0, %v1259
    %v1261 = vrot.slane %v1178, %v1260
    %v1262 = vmul.f32 %v866, %v1257
    %v1263 = vmul.f32 %v867, %v1261
    %v1264 = vmul.f32 %v868, %v1257
    %v1265 = vmul.f32 %v869, %v1261
    %v1266 = vmul.f32 %v870, %v1257
    %v1267 = vmul.f32 %v871, %v1261
    %v1268 = vmul.f32 %v872, %v1257
    %v1269 = vmul.f32 %v873, %v1261
    %v1270 = vlaneseq
    %v1271 = vshrl.u32 %v1270, 7
    %v1272 = vsub.s32 0, %v1271
    %v1273 = vrot.slane %v1250, %v1272
    %v1274 = vlaneseq
    %v1275 = vshrl.u32 %v1274, 7
    %v1276 = vsub.s32 0, %v1275
    %v1277 = vrot.slane %v1252, %v1276
    %v1278 = vadd.f32 %v1262, %v1273
    %v1279 = vadd.f32 %v1263, %v1277
    %v1280 = vadd.f32 %v1264, %v1273
    %v1281 = vadd.f32 %v1265, %v1277
    %v1282 = vadd.f32 %v1266, %v1273
    %v1283 = vadd.f32 %v1267, %v1277
    %v1284 = vadd.f32 %v1268, %v1273
    %v1285 = vadd.f32 %v1269, %v1277
    %vm1286 = vcmp.ge.f32.partialorder %v1278, 0.0
    %vm1287 = vcmp.ge.f32.partialorder %v1279, 0.0
    %vm1288 = vcmp.ge.f32.partialorder %v1280, 0.0
    %vm1289 = vcmp.ge.f32.partialorder %v1281, 0.0
    %vm1290 = vcmp.ge.f32.partialorder %v1282, 0.0
    %vm1291 = vcmp.ge.f32.partialorder %v1283, 0.0
    %vm1292 = vcmp.ge.f32.partialorder %v1284, 0.0
    %vm1293 = vcmp.ge.f32.partialorder %v1285, 0.0
    %v1294 = vmul.f32 %v1278, 0.01
    %v1295 = vmul.f32 %v1279, 0.01
    %v1296 = vmul.f32 %v1280, 0.01
    %v1297 = vmul.f32 %v1281, 0.01
    %v1298 = vmul.f32 %v1282, 0.01
    %v1299 = vmul.f32 %v1283, 0.01
    %v1300 = vmul.f32 %v1284, 0.01
    %v1301 = vmul.f32 %v1285, 0.01
    %v1302 = vsel %vm1286, %v1278, %v1294
    %v1303 = vsel %vm1287, %v1279, %v1295
    %v1304 = vsel %vm1288, %v1280, %v1296
    %v1305 = vsel %vm1289, %v1281, %v1297
    %v1306 = vsel %vm1290, %v1282, %v1298
    %v1307 = vsel %vm1291, %v1283, %v1299
    %v1308 = vsel %vm1292, %v1284, %v1300
    %v1309 = vsel %vm1293, %v1285, %v1301
    %1310 = vst [vmem:[#allocation2] sm:$0xff] %v1302
    %1311 = vst [vmem:[#allocation2 + $0x8] sm:$0xff] %v1303
    %1312 = vst [vmem:[#allocation2 + $0x10] sm:$0xff] %v1304
    %1313 = vst [vmem:[#allocation2 + $0x18] sm:$0xff] %v1305
    %1314 = vst [vmem:[#allocation2 + $0x20] sm:$0xff] %v1306
    %1315 = vst [vmem:[#allocation2 + $0x28] sm:$0xff] %v1307
    %1316 = vst [vmem:[#allocation2 + $0x30] sm:$0xff] %v1308
    %1317 = vst [vmem:[#allocation2 + $0x38] sm:$0xff] %v1309
    // Predicated region
    $region54: #{tpu_custom_call.1} parent=1 // pred_check
      _
    $region55: #{tpu_custom_call.1} parent=1 // pred_check_branch
      %1319 = sbr.rel (0) target = $region57
    $region56: #{tpu_custom_call.1} parent=1 // pred_region
      %s1321 = ssub.s32 1024, 1024
      %1322 = vsyncadd [#allocation3], %s1321
      %s1323 = sshll.u32 [#allocation2], 4
      %s1324 = int_to_ptr.vmem [resolvable:$true] %s1323
      %1329 = dma.vmem_to_hbm [thread:$0]  %s1324, 1024, %s13, [#allocation3], 256, 256, 16
    $region57: #{tpu_custom_call.1} parent=1 // pred_fallthru
      _
    // Predicated region
    $region58: #{tpu_custom_call.1} parent=1 // pred_check
      _
    $region59: #{tpu_custom_call.1} parent=1 // pred_check_branch
      %1331 = sbr.rel (0) target = $region61
    $region60: #{tpu_custom_call.1} parent=1 // pred_region
      %1332 = dma.done [#allocation3], 1024
    $region61: #{tpu_custom_call.1} parent=1 // pred_fallthru
      _
    %1333 = vsyncpa [#allocation3], 1

</llo_original>
